<compile_context>
chip_gen: v7x
topology: tpu7x:2x2x1
jax: 0.10.0
libtpu: 0.0.40
codegen_flags: <defaults>
</compile_context>

<pallas_src>
import functools
import math

import jax
import jax.numpy as jnp
from jax.experimental import pallas as pl
from jax.experimental.pallas import tpu as pltpu

_MIB = 1024 * 1024


def _layer_norm(y, gamma, beta, eps=1e-5):
    mu = jnp.mean(y, axis=-1, keepdims=True)
    var = jnp.mean((y - mu) ** 2, axis=-1, keepdims=True)
    return (y - mu) * jax.lax.rsqrt(var + eps) * gamma + beta


def _vmem_capacity_bytes():
    """Generation-aware physical VMEM (128 MiB on v5e/v6e, 64 MiB per-TC on v7x)."""
    try:
        return int(pltpu.get_tpu_info().vmem_capacity_bytes)
    except Exception:
        return 128 * _MIB


def _encoder_block_kernel(
    # ---- inputs ----
    x_q_ref,     # (1, TQ, D)     f32   query rows of this tile (also residual source)
    k_ref,       # (1, H, S, dk)  cdt   pre-projected keys   (head-major)
    v_ref,       # (1, H, S, dv)  cdt   pre-projected values (head-major)
    wq_ref,      # (D, H*dk)      cdt   fused Q projection, pre-scaled by 1/sqrt(dk)
    wo_ref,      # (H*dv, D)      cdt
    w1_ref,      # (D, TF)        cdt   dff chunk (TF == dff when resident)
    b1_ref,      # (1, TF)        f32
    w2_ref,      # (TF, D)        cdt
    b2_ref,      # (1, D)         f32
    g1_ref, be1_ref, g2_ref, be2_ref,   # (1, D) f32 LayerNorm affine
    # ---- outputs ----
    o_ref,       # (1, TQ, D)     f32
    # ---- scratch ----
    h1_ref,      # (TQ, D) f32  LN1 output (f32 residual source for LN2)
    h1c_ref,     # (TQ, D) cdt  LN1 output cached in compute dtype for FFN chunks
    acc_ref,     # (TQ, D) f32  FFN accumulator over dff chunks
    *,
    num_heads, d_k, d_v, compute_dtype, approx_recip,
):
    df = pl.program_id(2)

    # --- attention + residual + LN1: only on the first dff chunk of each (b, q-tile) ---
    @pl.when(df == 0)
    def _attention_and_ln1():
        x_q = x_q_ref[0]                              # (TQ, D) f32
        tq = x_q.shape[0]

        # Q projection (softmax scale already folded into wq); f32 accumulation.
        # NOTE: Q is accumulated in f32 then re-cast to the compute dtype before the
        # score matmul (intentional double rounding, matches K/V prep outside).
        q = jnp.dot(x_q.astype(compute_dtype), wq_ref[...],
                    preferred_element_type=jnp.float32)               # (TQ, H*dk)
        q3 = jnp.transpose(
            q.astype(compute_dtype).reshape(tq, num_heads, d_k), (1, 0, 2))  # (H, TQ, dk)

        k3 = k_ref[0]                                 # (H, S, dk) cdt
        v3 = v_ref[0]                                 # (H, S, dv) cdt

        # Head-batched scores / softmax / PV (no per-head slicing or concat).
        s = jnp.einsum("hqd,hkd->hqk", q3, k3,
                       preferred_element_type=jnp.float32)            # (H, TQ, S) f32
        s = s - jnp.max(s, axis=-1, keepdims=True)
        p = jnp.exp(s)
        denom = jnp.sum(p, axis=-1, keepdims=True)
        if approx_recip:
            p = p * pl.reciprocal(denom, approx=True)
        else:
            p = p / denom
        o3 = jnp.einsum("hqk,hkd->hqd", p.astype(compute_dtype), v3,
                        preferred_element_type=jnp.float32)           # (H, TQ, dv) f32

        concat = jnp.transpose(o3, (1, 0, 2)).reshape(tq, num_heads * d_v)
        mha = jnp.dot(concat.astype(compute_dtype), wo_ref[...],
                      preferred_element_type=jnp.float32)             # (TQ, D) f32

        # dropout == identity (eval mode)
        h1 = _layer_norm(mha + x_q, g1_ref[...], be1_ref[...])
        h1_ref[...] = h1
        h1c_ref[...] = h1.astype(compute_dtype)
        acc_ref[...] = jnp.zeros_like(acc_ref)

    # --- FFN chunk over dff (every grid step); ReLU is elementwise so chunking is exact ---
    f = jnp.dot(h1c_ref[...], w1_ref[...],
                preferred_element_type=jnp.float32) + b1_ref[...]
    f = jnp.maximum(f, 0.0)                                           # (TQ, TF) f32
    acc_ref[...] += jnp.dot(f.astype(compute_dtype), w2_ref[...],
                            preferred_element_type=jnp.float32)       # (TQ, D)

    # --- residual + LN2 + lane-dense output store on the last dff chunk ---
    @pl.when(df == pl.num_programs(2) - 1)
    def _finalize():
        y = acc_ref[...] + b2_ref[...] + h1_ref[...]
        o_ref[0] = _layer_norm(y, g2_ref[...], be2_ref[...]).astype(o_ref.dtype)


def prepare_params(params, compute_dtype=jnp.bfloat16):
    """One-time weight preparation (do NOT call per forward).

    Fuses head projections to lane-dense layouts, folds the 1/sqrt(d_k) softmax scale
    into W_Q, and casts matmul weights to the MXU compute dtype.  Biases and LayerNorm
    affine parameters stay f32.
    """
    H, D, dk = params["W_Q"].shape
    dv = params["W_V"].shape[-1]
    dff = params["w1"].shape[-1]
    cdt = jnp.dtype(compute_dtype)
    f32 = jnp.float32
    scale = 1.0 / math.sqrt(dk)
    wq = (jnp.transpose(params["W_Q"], (1, 0, 2)).reshape(D, H * dk) * scale).astype(cdt)
    return {
        "compute_dtype": cdt,
        "h": H, "d_model": D, "d_k": dk, "d_v": dv, "d_ff": dff,
        "wq": wq,                                   # (D, H*dk), pre-scaled
        "wk_heads": params["W_K"].astype(cdt),      # (H, D, dk)  K projection (XLA side)
        "wv_heads": params["W_V"].astype(cdt),      # (H, D, dv)  V projection (XLA side)
        "wo": params["W_O"].astype(cdt),            # (H*dv, D)
        "w1": params["w1"].astype(cdt),             # (D, dff)
        "w2": params["w2"].astype(cdt),             # (dff, D)
        "b1": params["b1"].reshape(1, dff).astype(f32),
        "b2": params["b2"].reshape(1, D).astype(f32),
        "g1": params["ln1_w"].reshape(1, D).astype(f32),
        "be1": params["ln1_b"].reshape(1, D).astype(f32),
        "g2": params["ln2_w"].reshape(1, D).astype(f32),
        "be2": params["ln2_b"].reshape(1, D).astype(f32),
    }


def encoder_block(x, prep, *, tq=None, tf=None, approx_recip=None,
                  single_buffer_consts=False):
    """Fused EncoderBlock forward using prepared params (see prepare_params)."""
    B, S, D = x.shape
    H, dk, dv, dff = prep["h"], prep["d_k"], prep["d_v"], prep["d_ff"]
    cdt = prep["compute_dtype"]
    assert D == prep["d_model"]
    if approx_recip is None:
        approx_recip = cdt != jnp.dtype(jnp.float32)

    cap = _vmem_capacity_bytes()
    cs = jnp.dtype(cdt).itemsize

    # --- tile defaults: tq=256 feeds the 256-wide MXU on v6e/v7x; FFN weights resident
    #     whenever they fit comfortably in this generation's VMEM ---
    if tq is None:
        if S <= 256:
            tq = S
        elif S % 256 == 0:
            tq = 256
        elif S % 128 == 0:
            tq = 128
        else:
            tq = S
    if tf is None:
        if 2 * D * dff * cs <= cap // 4:
            tf = dff                      # fully VMEM-resident w1/w2
        elif dff % 1024 == 0:
            tf = 1024
        elif dff % 512 == 0:
            tf = 512
        else:
            tf = dff
    assert S % tq == 0 and (tq % 8 == 0 or tq == S)
    assert dff % tf == 0 and (tf % 128 == 0 or tf == dff)
    n_q, n_f = S // tq, dff // tf
    resident_ffn = n_f == 1

    # --- K/V projected ONCE per call by XLA (not per q-tile), head-major, compute dtype ---
    x_c = x.astype(cdt)
    k_heads = jnp.einsum("bsd,hdk->bhsk", x_c, prep["wk_heads"],
                         preferred_element_type=jnp.float32).astype(cdt)   # (B,H,S,dk)
    v_heads = jnp.einsum("bsd,hdv->bhsv", x_c, prep["wv_heads"],
                         preferred_element_type=jnp.float32).astype(cdt)   # (B,H,S,dv)

    def _const(shape):
        """Whole-array block with constant index (fetched once by the pipeline).
        Optionally single-buffered to save VMEM (v7x)."""
        imap = lambda b, qi, df, _n=len(shape): (0,) * _n
        if single_buffer_consts and hasattr(pl, "Buffered"):
            try:
                return pl.BlockSpec(shape, imap, pipeline_mode=pl.Buffered(1))
            except TypeError:
                pass
        return pl.BlockSpec(shape, imap)

    if resident_ffn:
        w1_spec, b1_spec, w2_spec = _const((D, dff)), _const((1, dff)), _const((dff, D))
    else:
        w1_spec = pl.BlockSpec((D, tf), lambda b, qi, df: (0, df))
        b1_spec = pl.BlockSpec((1, tf), lambda b, qi, df: (0, df))
        w2_spec = pl.BlockSpec((tf, D), lambda b, qi, df: (df, 0))

    # --- VMEM budget derived from the working set, clamped to 3/4 of physical VMEM ---
    nb_c = 1 if single_buffer_consts else 2
    nb_f = nb_c if resident_ffn else 2
    ws = (
        4 * tq * D * 4                               # x_q + out blocks (double buffered)
        + 2 * H * S * (dk + dv) * cs                 # K / V blocks
        + nb_c * (D * H * dk + H * dv * D) * cs      # W_Q / W_O
        + nb_f * 2 * D * tf * cs                     # w1 / w2 chunks (or resident)
        + 2 * 4 * (tf + 5 * D)                       # biases + LayerNorm affine
        + tq * D * (4 + 4 + cs)                      # h1 / acc / h1c scratch
        + H * tq * S * 4                             # attention score temporaries
        + 2 * tq * max(tf, H * (dk + dv)) * 4        # FFN / head intermediates
    )
    vmem_limit = int(max(min(int(1.5 * ws), cap * 3 // 4), 32 * _MIB))

    kernel = functools.partial(
        _encoder_block_kernel,
        num_heads=H, d_k=dk, d_v=dv,
        compute_dtype=cdt, approx_recip=approx_recip)

    grid_spec = pltpu.PrefetchScalarGridSpec(
        num_scalar_prefetch=0,
        # b outermost keeps the per-b K/V blocks resident across q-tiles/dff-chunks.
        grid=(B, n_q, n_f),
        in_specs=[
            pl.BlockSpec((1, tq, D), lambda b, qi, df: (b, qi, 0)),        # x (query rows)
            pl.BlockSpec((1, H, S, dk), lambda b, qi, df: (b, 0, 0, 0)),   # K (per-b)
            pl.BlockSpec((1, H, S, dv), lambda b, qi, df: (b, 0, 0, 0)),   # V (per-b)
            _const((D, H * dk)),                                           # W_Q fused+scaled
            _const((H * dv, D)),                                           # W_O
            w1_spec,                                                       # w1 (chunk/resident)
            b1_spec,                                                       # b1
            w2_spec,                                                       # w2
            _const((1, D)),                                                # b2
            _const((1, D)), _const((1, D)),                                # ln1 w, b
            _const((1, D)), _const((1, D)),                                # ln2 w, b
        ],
        out_specs=pl.BlockSpec((1, tq, D), lambda b, qi, df: (b, qi, 0)),
        scratch_shapes=[
            pltpu.VMEM((tq, D), jnp.float32),   # h1 (LN1 output, f32)
            pltpu.VMEM((tq, D), cdt),           # h1 cached in compute dtype
            pltpu.VMEM((tq, D), jnp.float32),   # FFN accumulator
        ],
    )

    return pl.pallas_call(
        kernel,
        out_shape=jax.ShapeDtypeStruct((B, S, D), jnp.float32),
        grid_spec=grid_spec,
        compiler_params=pltpu.CompilerParams(
            # dff axis carries the accumulator and MUST stay "arbitrary"; b/qi are safe
            # to shard across v7x TensorCores since no scratch state is keyed on qi==0.
            dimension_semantics=("parallel", "parallel", "arbitrary"),
            vmem_limit_bytes=vmem_limit,
        ),
    )(x, k_heads, v_heads, prep["wq"], prep["wo"],
      prep["w1"], prep["b1"], prep["w2"], prep["b2"],
      prep["g1"], prep["be1"], prep["g2"], prep["be2"])


def _xavier_uniform(key, shape):
    if len(shape) == 3:
        rf = shape[0]
        fan_in, fan_out = shape[1] * rf, shape[2] * rf
    else:
        fan_in, fan_out = shape[0], shape[1]
    bound = math.sqrt(6.0 / (fan_in + fan_out))
    return jax.random.uniform(key, shape, jnp.float32, -bound, bound)


def init_params(key, h, d_model, d_k, d_v, d_ff):
    ks = jax.random.split(key, 8)
    lin1_bound = 1.0 / math.sqrt(d_model)
    lin2_bound = 1.0 / math.sqrt(d_ff)
    return {
        "W_Q": _xavier_uniform(ks[0], (h, d_model, d_k)),
        "W_K": _xavier_uniform(ks[1], (h, d_model, d_k)),
        "W_V": _xavier_uniform(ks[2], (h, d_model, d_v)),
        "W_O": _xavier_uniform(ks[3], (h * d_v, d_model)),
        # nn.Linear stores (out, in); we keep (in, out) so the kernel does x @ w + b
        "w1": jax.random.uniform(ks[4], (d_model, d_ff), jnp.float32,
                                 -lin1_bound, lin1_bound),
        "b1": jax.random.uniform(ks[5], (d_ff,), jnp.float32,
                                 -lin1_bound, lin1_bound),
        "w2": jax.random.uniform(ks[6], (d_ff, d_model), jnp.float32,
                                 -lin2_bound, lin2_bound),
        "b2": jax.random.uniform(ks[7], (d_model,), jnp.float32,
                                 -lin2_bound, lin2_bound),
        "ln1_w": jnp.ones((d_model,), jnp.float32),
        "ln1_b": jnp.zeros((d_model,), jnp.float32),
        "ln2_w": jnp.ones((d_model,), jnp.float32),
        "ln2_b": jnp.zeros((d_model,), jnp.float32),
    }


def reference_forward(x, params):
    """Pure-JAX (f32) reference of EncoderBlock.forward (dropout = identity)."""
    d_k = params["W_Q"].shape[-1]
    q = jnp.einsum("bsd,hdk->bhsk", x, params["W_Q"])
    k = jnp.einsum("bsd,hdk->bhsk", x, params["W_K"])
    v = jnp.einsum("bsd,hdv->bhsv", x, params["W_V"])
    s = jnp.einsum("bhsk,bhtk->bhst", q, k) / math.sqrt(d_k)
    p = jax.nn.softmax(s, axis=-1)
    heads = jnp.einsum("bhst,bhtv->bhsv", p, v)
    concat = jnp.transpose(heads, (0, 2, 1, 3)).reshape(x.shape[0], x.shape[1], -1)
    mha = concat @ params["W_O"]

    def ln(y, g, b):
        mu = jnp.mean(y, -1, keepdims=True)
        var = jnp.mean((y - mu) ** 2, -1, keepdims=True)
        return (y - mu) * jax.lax.rsqrt(var + 1e-5) * g + b

    h1 = ln(mha + x, params["ln1_w"], params["ln1_b"])
    f = jnp.maximum(h1 @ params["w1"] + params["b1"], 0.0) @ params["w2"] + params["b2"]
    return ln(f + h1, params["ln2_w"], params["ln2_b"])


if __name__ == "__main__":
    # Small shapes that still exercise the full (B, q-tile, dff-chunk) grid: 2 x 2 x 2.
    B, S = 2, 16
    h, d_model, d_k, d_v, d_ff = 4, 32, 8, 8, 256

    key = jax.random.PRNGKey(0)
    kx, kp = jax.random.split(key)
    x = jax.random.normal(kx, (B, S, d_model), jnp.float32)
    params = init_params(kp, h, d_model, d_k, d_v, d_ff)

    ref = reference_forward(x, params)

    # 1) Strict semantic check: f32 MXU operands, exact softmax divide, chunked FFN
    #    (exercises the 2x2x2 grid + dff accumulator path).
    prep_f32 = prepare_params(params, jnp.float32)
    out_f32 = jax.block_until_ready(encoder_block(x, prep_f32, tq=8, tf=128))
    assert out_f32.shape == (B, S, d_model)
    assert jnp.allclose(out_f32, ref, atol=1e-3, rtol=1e-3), "f32 mismatch vs reference"

    # 2) Fast path: bf16 MXU operands / f32 accumulation, VMEM-resident FFN (defaults).
    prep_bf16 = prepare_params(params, jnp.bfloat16)
    out_bf16 = jax.block_until_ready(encoder_block(x, prep_bf16))
    assert out_bf16.shape == (B, S, d_model)
    assert jnp.allclose(out_bf16, ref, atol=1e-1, rtol=1e-1), "bf16 mismatch vs reference"

    # 3) bf16 with the chunked (streaming w1/w2) FFN path.
    out_bf16_chunked = jax.block_until_ready(encoder_block(x, prep_bf16, tq=8, tf=128))
    assert jnp.allclose(out_bf16_chunked, ref, atol=1e-1, rtol=1e-1), "bf16 chunked mismatch"

    # 4) Best-effort: single-buffered constant weights (VMEM saver for v7x's 64 MiB).
    #    pl.Buffered(1) in a top-level pallas_call is not supported by every JAX release,
    #    so tolerate failure here rather than breaking the run.
    try:
        out_sb = jax.block_until_ready(
            encoder_block(x, prep_bf16, single_buffer_consts=True))
        assert jnp.allclose(out_sb, ref, atol=1e-1, rtol=1e-1)
    except Exception:
        pass  # TODO(synk): enable unconditionally once Buffered(1) is universally supported.

    print("KERNEL_OK")
</pallas_src>

<mosaic_0001>
module attributes {stable_mosaic.version = 11 : i64} {
  func.func @_encoder_block_kernel(%arg0: i32, %arg1: i32, %arg2: i32, %arg3: memref<1x8x32xf32, #tpu.memory_space<vmem>>, %arg4: memref<1x4x16x8xf32, #tpu.memory_space<vmem>>, %arg5: memref<1x4x16x8xf32, #tpu.memory_space<vmem>>, %arg6: memref<32x32xf32, #tpu.memory_space<vmem>>, %arg7: memref<32x32xf32, #tpu.memory_space<vmem>>, %arg8: memref<32x128xf32, #tpu.memory_space<vmem>>, %arg9: memref<1x128xf32, #tpu.memory_space<vmem>>, %arg10: memref<128x32xf32, #tpu.memory_space<vmem>>, %arg11: memref<1x32xf32, #tpu.memory_space<vmem>>, %arg12: memref<1x32xf32, #tpu.memory_space<vmem>>, %arg13: memref<1x32xf32, #tpu.memory_space<vmem>>, %arg14: memref<1x32xf32, #tpu.memory_space<vmem>>, %arg15: memref<1x32xf32, #tpu.memory_space<vmem>>, %arg16: memref<1x8x32xf32, #tpu.memory_space<vmem>>, %arg17: memref<8x32xf32, #tpu.memory_space<vmem>>, %arg18: memref<8x32xf32, #tpu.memory_space<vmem>>, %arg19: memref<8x32xf32, #tpu.memory_space<vmem>>) attributes {dimension_semantics = [#tpu.dimension_semantics<parallel>, #tpu.dimension_semantics<parallel>, #tpu.dimension_semantics<arbitrary>], iteration_bounds = array<i64: 2, 2, 2>, scalar_prefetch = 0 : i64, scratch_operands = 3 : i64, tpu.core_type = #tpu.core_type<tc>, window_params = [{transform_indices = @transform_0, window_bounds = array<i64: 1, 8, 32>}, {transform_indices = @transform_1, window_bounds = array<i64: 1, 4, 16, 8>}, {transform_indices = @transform_2, window_bounds = array<i64: 1, 4, 16, 8>}, {pipeline_mode = #tpu.pipeline_mode<synchronous>, transform_indices = @transform_3, window_bounds = array<i64: 32, 32>}, {pipeline_mode = #tpu.pipeline_mode<synchronous>, transform_indices = @transform_4, window_bounds = array<i64: 32, 32>}, {transform_indices = @transform_5, window_bounds = array<i64: 32, 128>}, {transform_indices = @transform_6, window_bounds = array<i64: 1, 128>}, {transform_indices = @transform_7, window_bounds = array<i64: 128, 32>}, {pipeline_mode = #tpu.pipeline_mode<synchronous>, transform_indices = @transform_8, window_bounds = array<i64: 1, 32>}, {pipeline_mode = #tpu.pipeline_mode<synchronous>, transform_indices = @transform_9, window_bounds = array<i64: 1, 32>}, {pipeline_mode = #tpu.pipeline_mode<synchronous>, transform_indices = @transform_10, window_bounds = array<i64: 1, 32>}, {pipeline_mode = #tpu.pipeline_mode<synchronous>, transform_indices = @transform_11, window_bounds = array<i64: 1, 32>}, {pipeline_mode = #tpu.pipeline_mode<synchronous>, transform_indices = @transform_12, window_bounds = array<i64: 1, 32>}, {transform_indices = @transform_13, window_bounds = array<i64: 1, 8, 32>}]} {
    %c0_i32 = arith.constant 0 : i32
    %0 = arith.cmpi eq, %arg2, %c0_i32 : i32
    %1 = arith.extui %0 : i1 to i32
    %c0_i32_0 = arith.constant 0 : i32
    %2 = arith.cmpi ne, %1, %c0_i32_0 : i32
    scf.if %2 {
      %c0_15 = arith.constant 0 : index
      %c0_16 = arith.constant 0 : index
      %c0_17 = arith.constant 0 : index
      %19 = vector.load %arg3[%c0_15, %c0_16, %c0_17] : memref<1x8x32xf32, #tpu.memory_space<vmem>>, vector<1x8x32xf32>
      %20 = vector.shape_cast %19 : vector<1x8x32xf32> to vector<8x32xf32>
      %c0_18 = arith.constant 0 : index
      %c0_19 = arith.constant 0 : index
      %21 = vector.load %arg6[%c0_18, %c0_19] : memref<32x32xf32, #tpu.memory_space<vmem>>, vector<32x32xf32>
      %cst_20 = arith.constant dense<0.000000e+00> : vector<8x32xf32>
      %22 = tpu.matmul %20, %21, %cst_20 {dimension_numbers = #tpu.dot_dimension_numbers<[1], [0], [0], [1], [0, 0, 1, 1], [], []>} : vector<8x32xf32>, vector<32x32xf32>, vector<8x32xf32> -> vector<8x32xf32>
      %23 = vector.shape_cast %22 : vector<8x32xf32> to vector<8x4x8xf32>
      %24 = tpu.transpose %23, [1, 0, 2] : vector<8x4x8xf32> -> vector<4x8x8xf32>
      %c0_21 = arith.constant 0 : index
      %c0_22 = arith.constant 0 : index
      %c0_23 = arith.constant 0 : index
      %c0_24 = arith.constant 0 : index
      %25 = vector.load %arg4[%c0_21, %c0_22, %c0_23, %c0_24] : memref<1x4x16x8xf32, #tpu.memory_space<vmem>>, vector<1x4x16x8xf32>
      %26 = vector.shape_cast %25 : vector<1x4x16x8xf32> to vector<4x16x8xf32>
      %c0_25 = arith.constant 0 : index
      %c0_26 = arith.constant 0 : index
      %c0_27 = arith.constant 0 : index
      %c0_28 = arith.constant 0 : index
      %27 = vector.load %arg5[%c0_25, %c0_26, %c0_27, %c0_28] : memref<1x4x16x8xf32, #tpu.memory_space<vmem>>, vector<1x4x16x8xf32>
      %28 = vector.shape_cast %27 : vector<1x4x16x8xf32> to vector<4x16x8xf32>
      "tpu.trace_start"() <{level = 10 : i32, message = "hqd,hkd->hqk"}> : () -> ()
      %cst_29 = arith.constant dense<0.000000e+00> : vector<4x8x16xf32>
      %29 = tpu.matmul %24, %26, %cst_29 {dimension_numbers = #tpu.dot_dimension_numbers<[2], [2], [1], [1], [0, 0, 0, 1, 1, 1], [0], [0]>} : vector<4x8x8xf32>, vector<4x16x8xf32>, vector<4x8x16xf32> -> vector<4x8x16xf32>
      "tpu.trace_stop"() : () -> ()
      %cst_30 = arith.constant dense<0xFF800000> : vector<4x8xf32>
      %30 = vector.multi_reduction <maximumf>, %29, %cst_30 [2] : vector<4x8x16xf32> to vector<4x8xf32>
      %31 = vector.shape_cast %30 : vector<4x8xf32> to vector<4x8x1xf32>
      %32 = vector.broadcast %31 : vector<4x8x1xf32> to vector<4x8x16xf32>
      %33 = arith.subf %29, %32 : vector<4x8x16xf32>
      %34 = math.exp %33 : vector<4x8x16xf32>
      %cst_31 = arith.constant dense<0.000000e+00> : vector<4x8xf32>
      %35 = vector.multi_reduction <add>, %34, %cst_31 [2] : vector<4x8x16xf32> to vector<4x8xf32>
      %36 = vector.shape_cast %35 : vector<4x8xf32> to vector<4x8x1xf32>
      %37 = vector.broadcast %36 : vector<4x8x1xf32> to vector<4x8x16xf32>
      %38 = arith.divf %34, %37 : vector<4x8x16xf32>
      "tpu.trace_start"() <{level = 10 : i32, message = "hqk,hkd->hqd"}> : () -> ()
      %cst_32 = arith.constant dense<0.000000e+00> : vector<4x8x8xf32>
      %39 = tpu.matmul %38, %28, %cst_32 {dimension_numbers = #tpu.dot_dimension_numbers<[2], [1], [1], [2], [0, 0, 0, 1, 1, 2], [0], [0]>} : vector<4x8x16xf32>, vector<4x16x8xf32>, vector<4x8x8xf32> -> vector<4x8x8xf32>
      "tpu.trace_stop"() : () -> ()
      %40 = tpu.transpose %39, [1, 0, 2] : vector<4x8x8xf32> -> vector<8x4x8xf32>
      %41 = vector.shape_cast %40 : vector<8x4x8xf32> to vector<8x32xf32>
      %c0_33 = arith.constant 0 : index
      %c0_34 = arith.constant 0 : index
      %42 = vector.load %arg7[%c0_33, %c0_34] : memref<32x32xf32, #tpu.memory_space<vmem>>, vector<32x32xf32>
      %cst_35 = arith.constant dense<0.000000e+00> : vector<8x32xf32>
      %43 = tpu.matmul %41, %42, %cst_35 {dimension_numbers = #tpu.dot_dimension_numbers<[1], [0], [0], [1], [0, 0, 1, 1], [], []>} : vector<8x32xf32>, vector<32x32xf32>, vector<8x32xf32> -> vector<8x32xf32>
      %44 = arith.addf %43, %20 : vector<8x32xf32>
      %c0_36 = arith.constant 0 : index
      %c0_37 = arith.constant 0 : index
      %45 = vector.load %arg12[%c0_36, %c0_37] : memref<1x32xf32, #tpu.memory_space<vmem>>, vector<1x32xf32>
      %c0_38 = arith.constant 0 : index
      %c0_39 = arith.constant 0 : index
      %46 = vector.load %arg13[%c0_38, %c0_39] : memref<1x32xf32, #tpu.memory_space<vmem>>, vector<1x32xf32>
      %cst_40 = arith.constant dense<0.000000e+00> : vector<8xf32>
      %47 = vector.multi_reduction <add>, %44, %cst_40 [1] : vector<8x32xf32> to vector<8xf32>
      %48 = vector.shape_cast %47 : vector<8xf32> to vector<8x1xf32>
      %cst_41 = arith.constant 3.200000e+01 : f32
      %49 = vector.broadcast %cst_41 : f32 to vector<8x1xf32>
      %50 = arith.divf %48, %49 : vector<8x1xf32>
      %51 = vector.broadcast %50 : vector<8x1xf32> to vector<8x32xf32>
      %52 = arith.subf %44, %51 : vector<8x32xf32>
      %53 = arith.mulf %52, %52 : vector<8x32xf32>
      %cst_42 = arith.constant dense<0.000000e+00> : vector<8xf32>
      %54 = vector.multi_reduction <add>, %53, %cst_42 [1] : vector<8x32xf32> to vector<8xf32>
      %55 = vector.shape_cast %54 : vector<8xf32> to vector<8x1xf32>
      %cst_43 = arith.constant 3.200000e+01 : f32
      %56 = vector.broadcast %cst_43 : f32 to vector<8x1xf32>
      %57 = arith.divf %55, %56 : vector<8x1xf32>
      %58 = vector.broadcast %50 : vector<8x1xf32> to vector<8x32xf32>
      %59 = arith.subf %44, %58 : vector<8x32xf32>
      %cst_44 = arith.constant 9.99999974E-6 : f32
      %60 = vector.broadcast %cst_44 : f32 to vector<8x1xf32>
      %61 = arith.addf %57, %60 : vector<8x1xf32>
      %62 = math.rsqrt %61 : vector<8x1xf32>
      %63 = vector.broadcast %62 : vector<8x1xf32> to vector<8x32xf32>
      %64 = arith.mulf %59, %63 : vector<8x32xf32>
      %65 = vector.broadcast %45 : vector<1x32xf32> to vector<8x32xf32>
      %66 = arith.mulf %64, %65 : vector<8x32xf32>
      %67 = vector.broadcast %46 : vector<1x32xf32> to vector<8x32xf32>
      %68 = arith.addf %66, %67 : vector<8x32xf32>
      %c0_45 = arith.constant 0 : index
      %c0_46 = arith.constant 0 : index
      %69 = vector.load %arg17[%c0_45, %c0_46] : memref<8x32xf32, #tpu.memory_space<vmem>>, vector<8x32xf32>
      tpu.vector_store %arg17[%c0_45, %c0_46], %68 {strides = array<i32>} : memref<8x32xf32, #tpu.memory_space<vmem>>, vector<8x32xf32>,
      %c0_47 = arith.constant 0 : index
      %c0_48 = arith.constant 0 : index
      %70 = vector.load %arg18[%c0_47, %c0_48] : memref<8x32xf32, #tpu.memory_space<vmem>>, vector<8x32xf32>
      tpu.vector_store %arg18[%c0_47, %c0_48], %68 {strides = array<i32>} : memref<8x32xf32, #tpu.memory_space<vmem>>, vector<8x32xf32>,
      %cst_49 = arith.constant 0.000000e+00 : f32
      %71 = vector.broadcast %cst_49 : f32 to vector<8x32xf32>
      %c0_50 = arith.constant 0 : index
      %c0_51 = arith.constant 0 : index
      %72 = vector.load %arg19[%c0_50, %c0_51] : memref<8x32xf32, #tpu.memory_space<vmem>>, vector<8x32xf32>
      tpu.vector_store %arg19[%c0_50, %c0_51], %71 {strides = array<i32>} : memref<8x32xf32, #tpu.memory_space<vmem>>, vector<8x32xf32>,
    } else {
    }
    %c0 = arith.constant 0 : index
    %c0_1 = arith.constant 0 : index
    %3 = vector.load %arg18[%c0, %c0_1] : memref<8x32xf32, #tpu.memory_space<vmem>>, vector<8x32xf32>
    %c0_2 = arith.constant 0 : index
    %c0_3 = arith.constant 0 : index
    %4 = vector.load %arg8[%c0_2, %c0_3] : memref<32x128xf32, #tpu.memory_space<vmem>>, vector<32x128xf32>
    %cst = arith.constant dense<0.000000e+00> : vector<8x128xf32>
    %5 = tpu.matmul %3, %4, %cst {dimension_numbers = #tpu.dot_dimension_numbers<[1], [0], [0], [1], [0, 0, 1, 1], [], []>} : vector<8x32xf32>, vector<32x128xf32>, vector<8x128xf32> -> vector<8x128xf32>
    %c0_4 = arith.constant 0 : index
    %c0_5 = arith.constant 0 : index
    %6 = vector.load %arg9[%c0_4, %c0_5] : memref<1x128xf32, #tpu.memory_space<vmem>>, vector<1x128xf32>
    %7 = vector.broadcast %6 : vector<1x128xf32> to vector<8x128xf32>
    %8 = arith.addf %5, %7 : vector<8x128xf32>
    %cst_6 = arith.constant 0.000000e+00 : f32
    %9 = vector.broadcast %cst_6 : f32 to vector<8x128xf32>
    %10 = arith.maximumf %8, %9 : vector<8x128xf32>
    %c0_7 = arith.constant 0 : index
    %c0_8 = arith.constant 0 : index
    %11 = vector.load %arg19[%c0_7, %c0_8] : memref<8x32xf32, #tpu.memory_space<vmem>>, vector<8x32xf32>
    %c0_9 = arith.constant 0 : index
    %c0_10 = arith.constant 0 : index
    %12 = vector.load %arg10[%c0_9, %c0_10] : memref<128x32xf32, #tpu.memory_space<vmem>>, vector<128x32xf32>
    %cst_11 = arith.constant dense<0.000000e+00> : vector<8x32xf32>
    %13 = tpu.matmul %10, %12, %cst_11 {dimension_numbers = #tpu.dot_dimension_numbers<[1], [0], [0], [1], [0, 0, 1, 1], [], []>} : vector<8x128xf32>, vector<128x32xf32>, vector<8x32xf32> -> vector<8x32xf32>
    %14 = arith.addf %11, %13 : vector<8x32xf32>
    %c0_12 = arith.constant 0 : index
    %c0_13 = arith.constant 0 : index
    %15 = vector.load %arg19[%c0_12, %c0_13] : memref<8x32xf32, #tpu.memory_space<vmem>>, vector<8x32xf32>
    tpu.vector_store %arg19[%c0_12, %c0_13], %14 {strides = array<i32>} : memref<8x32xf32, #tpu.memory_space<vmem>>, vector<8x32xf32>,
    %c1_i32 = arith.constant 1 : i32
    %16 = arith.cmpi eq, %arg2, %c1_i32 : i32
    %17 = arith.extui %16 : i1 to i32
    %c0_i32_14 = arith.constant 0 : i32
    %18 = arith.cmpi ne, %17, %c0_i32_14 : i32
    scf.if %18 {
      %c0_15 = arith.constant 0 : index
      %c0_16 = arith.constant 0 : index
      %19 = vector.load %arg19[%c0_15, %c0_16] : memref<8x32xf32, #tpu.memory_space<vmem>>, vector<8x32xf32>
      %c0_17 = arith.constant 0 : index
      %c0_18 = arith.constant 0 : index
      %20 = vector.load %arg11[%c0_17, %c0_18] : memref<1x32xf32, #tpu.memory_space<vmem>>, vector<1x32xf32>
      %21 = vector.broadcast %20 : vector<1x32xf32> to vector<8x32xf32>
      %22 = arith.addf %19, %21 : vector<8x32xf32>
      %c0_19 = arith.constant 0 : index
      %c0_20 = arith.constant 0 : index
      %23 = vector.load %arg17[%c0_19, %c0_20] : memref<8x32xf32, #tpu.memory_space<vmem>>, vector<8x32xf32>
      %24 = arith.addf %22, %23 : vector<8x32xf32>
      %c0_21 = arith.constant 0 : index
      %c0_22 = arith.constant 0 : index
      %25 = vector.load %arg14[%c0_21, %c0_22] : memref<1x32xf32, #tpu.memory_space<vmem>>, vector<1x32xf32>
      %c0_23 = arith.constant 0 : index
      %c0_24 = arith.constant 0 : index
      %26 = vector.load %arg15[%c0_23, %c0_24] : memref<1x32xf32, #tpu.memory_space<vmem>>, vector<1x32xf32>
      %cst_25 = arith.constant dense<0.000000e+00> : vector<8xf32>
      %27 = vector.multi_reduction <add>, %24, %cst_25 [1] : vector<8x32xf32> to vector<8xf32>
      %28 = vector.shape_cast %27 : vector<8xf32> to vector<8x1xf32>
      %cst_26 = arith.constant 3.200000e+01 : f32
      %29 = vector.broadcast %cst_26 : f32 to vector<8x1xf32>
      %30 = arith.divf %28, %29 : vector<8x1xf32>
      %31 = vector.broadcast %30 : vector<8x1xf32> to vector<8x32xf32>
      %32 = arith.subf %24, %31 : vector<8x32xf32>
      %33 = arith.mulf %32, %32 : vector<8x32xf32>
      %cst_27 = arith.constant dense<0.000000e+00> : vector<8xf32>
      %34 = vector.multi_reduction <add>, %33, %cst_27 [1] : vector<8x32xf32> to vector<8xf32>
      %35 = vector.shape_cast %34 : vector<8xf32> to vector<8x1xf32>
      %cst_28 = arith.constant 3.200000e+01 : f32
      %36 = vector.broadcast %cst_28 : f32 to vector<8x1xf32>
      %37 = arith.divf %35, %36 : vector<8x1xf32>
      %38 = vector.broadcast %30 : vector<8x1xf32> to vector<8x32xf32>
      %39 = arith.subf %24, %38 : vector<8x32xf32>
      %cst_29 = arith.constant 9.99999974E-6 : f32
      %40 = vector.broadcast %cst_29 : f32 to vector<8x1xf32>
      %41 = arith.addf %37, %40 : vector<8x1xf32>
      %42 = math.rsqrt %41 : vector<8x1xf32>
      %43 = vector.broadcast %42 : vector<8x1xf32> to vector<8x32xf32>
      %44 = arith.mulf %39, %43 : vector<8x32xf32>
      %45 = vector.broadcast %25 : vector<1x32xf32> to vector<8x32xf32>
      %46 = arith.mulf %44, %45 : vector<8x32xf32>
      %47 = vector.broadcast %26 : vector<1x32xf32> to vector<8x32xf32>
      %48 = arith.addf %46, %47 : vector<8x32xf32>
      %c0_30 = arith.constant 0 : index
      %c0_31 = arith.constant 0 : index
      %c0_32 = arith.constant 0 : index
      %49 = vector.load %arg16[%c0_30, %c0_31, %c0_32] : memref<1x8x32xf32, #tpu.memory_space<vmem>>, vector<1x8x32xf32>
      %50 = vector.shape_cast %49 : vector<1x8x32xf32> to vector<8x32xf32>
      %51 = vector.shape_cast %48 : vector<8x32xf32> to vector<1x8x32xf32>
      tpu.vector_store %arg16[%c0_30, %c0_31, %c0_32], %51 {strides = array<i32>} : memref<1x8x32xf32, #tpu.memory_space<vmem>>, vector<1x8x32xf32>,
    } else {
    }
    return
  }
  func.func @transform_0(%arg0: i32, %arg1: i32, %arg2: i32) -> (i32, i32, i32) {
    %c0_i32 = arith.constant 0 : i32
    %c0_i32_0 = arith.constant 0 : i32
    return %arg0, %arg1, %c0_i32 : i32, i32, i32
  }
  func.func @transform_1(%arg0: i32, %arg1: i32, %arg2: i32) -> (i32, i32, i32, i32) {
    %c0_i32 = arith.constant 0 : i32
    %c0_i32_0 = arith.constant 0 : i32
    %c0_i32_1 = arith.constant 0 : i32
    %c0_i32_2 = arith.constant 0 : i32
    return %arg0, %c0_i32, %c0_i32_0, %c0_i32_1 : i32, i32, i32, i32
  }
  func.func @transform_2(%arg0: i32, %arg1: i32, %arg2: i32) -> (i32, i32, i32, i32) {
    %c0_i32 = arith.constant 0 : i32
    %c0_i32_0 = arith.constant 0 : i32
    %c0_i32_1 = arith.constant 0 : i32
    %c0_i32_2 = arith.constant 0 : i32
    return %arg0, %c0_i32, %c0_i32_0, %c0_i32_1 : i32, i32, i32, i32
  }
  func.func @transform_3(%arg0: i32, %arg1: i32, %arg2: i32) -> (i32, i32) {
    %c0_i32 = arith.constant 0 : i32
    %c0_i32_0 = arith.constant 0 : i32
    %c0_i32_1 = arith.constant 0 : i32
    return %c0_i32, %c0_i32_0 : i32, i32
  }
  func.func @transform_4(%arg0: i32, %arg1: i32, %arg2: i32) -> (i32, i32) {
    %c0_i32 = arith.constant 0 : i32
    %c0_i32_0 = arith.constant 0 : i32
    %c0_i32_1 = arith.constant 0 : i32
    return %c0_i32, %c0_i32_0 : i32, i32
  }
  func.func @transform_5(%arg0: i32, %arg1: i32, %arg2: i32) -> (i32, i32) {
    %c0_i32 = arith.constant 0 : i32
    %c0_i32_0 = arith.constant 0 : i32
    return %c0_i32, %arg2 : i32, i32
  }
  func.func @transform_6(%arg0: i32, %arg1: i32, %arg2: i32) -> (i32, i32) {
    %c0_i32 = arith.constant 0 : i32
    %c0_i32_0 = arith.constant 0 : i32
    return %c0_i32, %arg2 : i32, i32
  }
  func.func @transform_7(%arg0: i32, %arg1: i32, %arg2: i32) -> (i32, i32) {
    %c0_i32 = arith.constant 0 : i32
    %c0_i32_0 = arith.constant 0 : i32
    return %arg2, %c0_i32 : i32, i32
  }
  func.func @transform_8(%arg0: i32, %arg1: i32, %arg2: i32) -> (i32, i32) {
    %c0_i32 = arith.constant 0 : i32
    %c0_i32_0 = arith.constant 0 : i32
    %c0_i32_1 = arith.constant 0 : i32
    return %c0_i32, %c0_i32_0 : i32, i32
  }
  func.func @transform_9(%arg0: i32, %arg1: i32, %arg2: i32) -> (i32, i32) {
    %c0_i32 = arith.constant 0 : i32
    %c0_i32_0 = arith.constant 0 : i32
    %c0_i32_1 = arith.constant 0 : i32
    return %c0_i32, %c0_i32_0 : i32, i32
  }
  func.func @transform_10(%arg0: i32, %arg1: i32, %arg2: i32) -> (i32, i32) {
    %c0_i32 = arith.constant 0 : i32
    %c0_i32_0 = arith.constant 0 : i32
    %c0_i32_1 = arith.constant 0 : i32
    return %c0_i32, %c0_i32_0 : i32, i32
  }
  func.func @transform_11(%arg0: i32, %arg1: i32, %arg2: i32) -> (i32, i32) {
    %c0_i32 = arith.constant 0 : i32
    %c0_i32_0 = arith.constant 0 : i32
    %c0_i32_1 = arith.constant 0 : i32
    return %c0_i32, %c0_i32_0 : i32, i32
  }
  func.func @transform_12(%arg0: i32, %arg1: i32, %arg2: i32) -> (i32, i32) {
    %c0_i32 = arith.constant 0 : i32
    %c0_i32_0 = arith.constant 0 : i32
    %c0_i32_1 = arith.constant 0 : i32
    return %c0_i32, %c0_i32_0 : i32, i32
  }
  func.func @transform_13(%arg0: i32, %arg1: i32, %arg2: i32) -> (i32, i32, i32) {
    %c0_i32 = arith.constant 0 : i32
    %c0_i32_0 = arith.constant 0 : i32
    return %arg0, %arg1, %c0_i32 : i32, i32, i32
  }
}

</mosaic_0001>

<llo_original>
// kernel: tpu_custom_call.1
$region0: #{tpu_custom_call.1}
  #allocation0 [shape = 'u32[]', space=smem, size = 0x4, offset = 0x4, fixed_abs, tag = 'smem constant byte address 0x4 - core index']
  #allocation1 [shape = 'u32[144,128]{1,0:T(1,128)}', space=vmem, size = 0x12000, scoped, tag = 'internal scratch']
  #allocation2 [shape = 'f32[8,32]{1,0:T(8,128)}', space=vmem, size = 0x1000, scoped, tag = 'scratch operand']
  #allocation3 [shape = 'f32[8,32]{1,0:T(8,128)}', space=vmem, size = 0x1000, scoped, tag = 'scratch operand']
  #allocation4 [shape = 'f32[8,32]{1,0:T(8,128)}', space=vmem, size = 0x1000, scoped, tag = 'scratch operand']
  %s0 = inlined_call_operand.vmem [shape: f32[2,16,32], index: 0, kind: input, shape index: {}]
  %s1 = inlined_call_operand.vmem [shape: f32[2,4,16,8], index: 1, kind: input, shape index: {}]
  %s2 = inlined_call_operand.vmem [shape: f32[2,4,16,8], index: 2, kind: input, shape index: {}]
  %s3 = inlined_call_operand.vmem [shape: f32[32,32], index: 3, kind: input, shape index: {}]
  %s4 = inlined_call_operand.vmem [shape: f32[32,32], index: 4, kind: input, shape index: {}]
  %s5 = inlined_call_operand.vmem [shape: f32[32,256], index: 5, kind: input, shape index: {}]
  %s6 = inlined_call_operand.vmem [shape: f32[1,256], index: 6, kind: input, shape index: {}]
  %s7 = inlined_call_operand.vmem [shape: f32[256,32], index: 7, kind: input, shape index: {}]
  %s8 = inlined_call_operand.vmem [shape: f32[1,32], index: 8, kind: input, shape index: {}]
  %s9 = inlined_call_operand.vmem [shape: f32[1,32], index: 9, kind: input, shape index: {}]
  %s10 = inlined_call_operand.vmem [shape: f32[1,32], index: 10, kind: input, shape index: {}]
  %s11 = inlined_call_operand.vmem [shape: f32[1,32], index: 11, kind: input, shape index: {}]
  %s12 = inlined_call_operand.vmem [shape: f32[1,32], index: 12, kind: input, shape index: {}]
  %s13 = inlined_call_operand.hbm [shape: f32[2,16,32], index: 13, kind: output, shape index: {}]
  %s14 = sld [smem:[#allocation0]]
  $region131: #{tpu_custom_call.1} parent=0
    _
  %s16 = ssub.s32 1, %s14
  %s17 = scalar_select 0, %s16, %s14
  $region1: #{tpu_custom_call.1} parent=0
    #allocation5 [shape = 'u8[32768]{0}', space=vmem, size = 0x8000, scoped, tag = 'input window, operand 5']
    #allocation6 [shape = 'u8[8192]{0}', space=vmem, size = 0x2000, scoped, tag = 'output window, operand 0']
    #allocation7 [shape = 's32[2]{0}', space=sflag, size = 0x8, scoped, tag = 'scoped memory for tpu_custom_call.1']
    %18 = vsyncpa [#allocation7], 0
    %s19 = scalar_lea.sflag [#allocation7], 1
    %20 = vsyncpa %s19, 0
    loop: start=0, step=1, limit=10
    $region2: #{tpu_custom_call.1} parent=1 // loop_pre_header
      _
    $region3: #{tpu_custom_call.1} parent=1 // loop_header
      %s22 = sphi 0, %s26
      %p23 = scmp.ge.s32.totalorder %s22, 10
      %s29 = sphi 0, %s48
      %s30 = sphi 0, %s44
      %s31 = sphi 0, %s40
      %s32 = sphi 0, %s29
      %s33 = sphi 0, %s30
      %s34 = sphi 0, %s31
      %s35 = sphi 0, %s32
      %s36 = sphi 0, %s33
      %s37 = sphi 0, %s34
      %s53 = sphi 0, %s55
      %s56 = sphi 0, %s53
      %s57 = sphi 0, %s56
      %s73 = sphi 0, %s57
      %s79 = sphi 0, %s81
      %s82 = sphi 0, %s79
      %s83 = sphi 0, %s82
      %s99 = sphi 0, %s83
      %s105 = sphi 0, %s107
      %s108 = sphi 0, %s105
      %s109 = sphi 0, %s108
      %s125 = sphi 0, %s109
      %s129 = sphi 0, %s129
      %s131 = sphi 0, %s129
      %s132 = sphi 0, %s131
      %s146 = sphi 0, %s132
      %s150 = sphi 0, %s150
      %s152 = sphi 0, %s150
      %s153 = sphi 0, %s152
      %s167 = sphi 0, %s153
      %s173 = sphi 0, %s175
      %s176 = sphi 0, %s173
      %s177 = sphi 0, %s176
      %s193 = sphi 0, %s177
      %s199 = sphi 0, %s201
      %s202 = sphi 0, %s199
      %s203 = sphi 0, %s202
      %s219 = sphi 0, %s203
      %s225 = sphi 0, %s227
      %s228 = sphi 0, %s225
      %s229 = sphi 0, %s228
      %s245 = sphi 0, %s229
      %s249 = sphi 0, %s249
      %s251 = sphi 0, %s249
      %s252 = sphi 0, %s251
      %s266 = sphi 0, %s252
      %s270 = sphi 0, %s270
      %s272 = sphi 0, %s270
      %s273 = sphi 0, %s272
      %s287 = sphi 0, %s273
      %s291 = sphi 0, %s291
      %s293 = sphi 0, %s291
      %s294 = sphi 0, %s293
      %s308 = sphi 0, %s294
      %s312 = sphi 0, %s312
      %s314 = sphi 0, %s312
      %s315 = sphi 0, %s314
      %s329 = sphi 0, %s315
      %s333 = sphi 0, %s333
      %s335 = sphi 0, %s333
      %s336 = sphi 0, %s335
      %s350 = sphi 0, %s336
      %s358 = sphi 0, %s360
      %s361 = sphi 0, %s358
      %s362 = sphi 0, %s361
      %s378 = sphi 0, %s362
    $region4: #{tpu_custom_call.1} parent=1 // loop_header_branch
      %25 = sbr.rel (%p23) target = $region8
    $region5: #{tpu_custom_call.1} parent=1 // loop_body
      %s27 = ssub.s32 %s22, 1
      %s28 = ssub.s32 %s22, 2
      %s38 = sadd.s32 1, %s31
      %p39 = scmp.ge.s32.totalorder %s38, 2
      %s40 = scalar_select %p39, 0, %s38
      %s41 = sadd.s32 1, %s30
      %s42 = scalar_select %p39, %s41, %s30
      %p43 = scmp.ge.s32.totalorder %s42, 2
      %s44 = scalar_select %p43, 0, %s42
      %s45 = sadd.s32 1, %s29
      %s46 = scalar_select %p43, %s45, %s29
      %p47 = scmp.ge.s32.totalorder %s46, 2
      %s48 = scalar_select %p47, 0, %s46
      %s49 = ssub.s32 %s29, %s48
      %s50 = ssub.s32 %s30, %s44
      %s51 = sor.u32 %s49, %s50
      %p52 = scmp.eq.s32.totalorder %s51, 0
      %s54 = sadd.s32 %s53, 1
      %s55 = scalar_select %p52, %s53, %s54
      %p58 = pneg %p52
      %p59 = scmp.eq.s32.totalorder %s22, 7
      %p60 = por %p58, %p59
      %p61 = scmp.ne.s32.totalorder %s53, %s56
      %p62 = scmp.eq.s32.totalorder %s22, 0
      %p63 = por %p61, %p62
      %p64 = scmp.ne.s32.totalorder %s53, %s56
      %p65 = scmp.eq.s32.totalorder %s27, 7
      %p66 = por %p64, %p65
      %p67 = scmp.ne.s32.totalorder %s56, %s57
      %p68 = scmp.eq.s32.totalorder %s27, 0
      %p69 = por %p67, %p68
      %p70 = scmp.ne.s32.totalorder %s56, %s57
      %p71 = scmp.eq.s32.totalorder %s28, 7
      %p72 = por %p70, %p71
      %p74 = scmp.ne.s32.totalorder %s57, %s73
      %p75 = scmp.eq.s32.totalorder %s28, 0
      %p76 = por %p74, %p75
      %s77 = ssub.s32 %s29, %s48
      %p78 = scmp.eq.s32.totalorder %s77, 0
      %s80 = sadd.s32 %s79, 1
      %s81 = scalar_select %p78, %s79, %s80
      %p84 = pneg %p78
      %p85 = scmp.eq.s32.totalorder %s22, 7
      %p86 = por %p84, %p85
      %p87 = scmp.ne.s32.totalorder %s79, %s82
      %p88 = scmp.eq.s32.totalorder %s22, 0
      %p89 = por %p87, %p88
      %p90 = scmp.ne.s32.totalorder %s79, %s82
      %p91 = scmp.eq.s32.totalorder %s27, 7
      %p92 = por %p90, %p91
      %p93 = scmp.ne.s32.totalorder %s82, %s83
      %p94 = scmp.eq.s32.totalorder %s27, 0
      %p95 = por %p93, %p94
      %p96 = scmp.ne.s32.totalorder %s82, %s83
      %p97 = scmp.eq.s32.totalorder %s28, 7
      %p98 = por %p96, %p97
      %p100 = scmp.ne.s32.totalorder %s83, %s99
      %p101 = scmp.eq.s32.totalorder %s28, 0
      %p102 = por %p100, %p101
      %s103 = ssub.s32 %s29, %s48
      %p104 = scmp.eq.s32.totalorder %s103, 0
      %s106 = sadd.s32 %s105, 1
      %s107 = scalar_select %p104, %s105, %s106
      %p110 = pneg %p104
      %p111 = scmp.eq.s32.totalorder %s22, 7
      %p112 = por %p110, %p111
      %p113 = scmp.ne.s32.totalorder %s105, %s108
      %p114 = scmp.eq.s32.totalorder %s22, 0
      %p115 = por %p113, %p114
      %p116 = scmp.ne.s32.totalorder %s105, %s108
      %p117 = scmp.eq.s32.totalorder %s27, 7
      %p118 = por %p116, %p117
      %p119 = scmp.ne.s32.totalorder %s108, %s109
      %p120 = scmp.eq.s32.totalorder %s27, 0
      %p121 = por %p119, %p120
      %p122 = scmp.ne.s32.totalorder %s108, %s109
      %p123 = scmp.eq.s32.totalorder %s28, 7
      %p124 = por %p122, %p123
      %p126 = scmp.ne.s32.totalorder %s109, %s125
      %p127 = scmp.eq.s32.totalorder %s28, 0
      %p128 = por %p126, %p127
      %s130 = sadd.s32 %s129, 1
      %p133 = scmp.eq.s32.totalorder %s22, 7
      %p134 = scmp.ne.s32.totalorder %s129, %s131
      %p135 = scmp.eq.s32.totalorder %s22, 0
      %p136 = por %p134, %p135
      %p137 = scmp.ne.s32.totalorder %s129, %s131
      %p138 = scmp.eq.s32.totalorder %s27, 7
      %p139 = por %p137, %p138
      %p140 = scmp.ne.s32.totalorder %s131, %s132
      %p141 = scmp.eq.s32.totalorder %s27, 0
      %p142 = por %p140, %p141
      %p143 = scmp.ne.s32.totalorder %s131, %s132
      %p144 = scmp.eq.s32.totalorder %s28, 7
      %p145 = por %p143, %p144
      %p147 = scmp.ne.s32.totalorder %s132, %s146
      %p148 = scmp.eq.s32.totalorder %s28, 0
      %p149 = por %p147, %p148
      %s151 = sadd.s32 %s150, 1
      %p154 = scmp.eq.s32.totalorder %s22, 7
      %p155 = scmp.ne.s32.totalorder %s150, %s152
      %p156 = scmp.eq.s32.totalorder %s22, 0
      %p157 = por %p155, %p156
      %p158 = scmp.ne.s32.totalorder %s150, %s152
      %p159 = scmp.eq.s32.totalorder %s27, 7
      %p160 = por %p158, %p159
      %p161 = scmp.ne.s32.totalorder %s152, %s153
      %p162 = scmp.eq.s32.totalorder %s27, 0
      %p163 = por %p161, %p162
      %p164 = scmp.ne.s32.totalorder %s152, %s153
      %p165 = scmp.eq.s32.totalorder %s28, 7
      %p166 = por %p164, %p165
      %p168 = scmp.ne.s32.totalorder %s153, %s167
      %p169 = scmp.eq.s32.totalorder %s28, 0
      %p170 = por %p168, %p169
      %s171 = ssub.s32 %s31, %s40
      %p172 = scmp.eq.s32.totalorder %s171, 0
      %s174 = sadd.s32 %s173, 1
      %s175 = scalar_select %p172, %s173, %s174
      %p178 = pneg %p172
      %p179 = scmp.eq.s32.totalorder %s22, 7
      %p180 = por %p178, %p179
      %p181 = scmp.ne.s32.totalorder %s173, %s176
      %p182 = scmp.eq.s32.totalorder %s22, 0
      %p183 = por %p181, %p182
      %p184 = scmp.ne.s32.totalorder %s173, %s176
      %p185 = scmp.eq.s32.totalorder %s27, 7
      %p186 = por %p184, %p185
      %p187 = scmp.ne.s32.totalorder %s176, %s177
      %p188 = scmp.eq.s32.totalorder %s27, 0
      %p189 = por %p187, %p188
      %p190 = scmp.ne.s32.totalorder %s176, %s177
      %p191 = scmp.eq.s32.totalorder %s28, 7
      %p192 = por %p190, %p191
      %p194 = scmp.ne.s32.totalorder %s177, %s193
      %p195 = scmp.eq.s32.totalorder %s28, 0
      %p196 = por %p194, %p195
      %s197 = ssub.s32 %s31, %s40
      %p198 = scmp.eq.s32.totalorder %s197, 0
      %s200 = sadd.s32 %s199, 1
      %s201 = scalar_select %p198, %s199, %s200
      %p204 = pneg %p198
      %p205 = scmp.eq.s32.totalorder %s22, 7
      %p206 = por %p204, %p205
      %p207 = scmp.ne.s32.totalorder %s199, %s202
      %p208 = scmp.eq.s32.totalorder %s22, 0
      %p209 = por %p207, %p208
      %p210 = scmp.ne.s32.totalorder %s199, %s202
      %p211 = scmp.eq.s32.totalorder %s27, 7
      %p212 = por %p210, %p211
      %p213 = scmp.ne.s32.totalorder %s202, %s203
      %p214 = scmp.eq.s32.totalorder %s27, 0
      %p215 = por %p213, %p214
      %p216 = scmp.ne.s32.totalorder %s202, %s203
      %p217 = scmp.eq.s32.totalorder %s28, 7
      %p218 = por %p216, %p217
      %p220 = scmp.ne.s32.totalorder %s203, %s219
      %p221 = scmp.eq.s32.totalorder %s28, 0
      %p222 = por %p220, %p221
      %s223 = ssub.s32 %s31, %s40
      %p224 = scmp.eq.s32.totalorder %s223, 0
      %s226 = sadd.s32 %s225, 1
      %s227 = scalar_select %p224, %s225, %s226
      %p230 = pneg %p224
      %p231 = scmp.eq.s32.totalorder %s22, 7
      %p232 = por %p230, %p231
      %p233 = scmp.ne.s32.totalorder %s225, %s228
      %p234 = scmp.eq.s32.totalorder %s22, 0
      %p235 = por %p233, %p234
      %p236 = scmp.ne.s32.totalorder %s225, %s228
      %p237 = scmp.eq.s32.totalorder %s27, 7
      %p238 = por %p236, %p237
      %p239 = scmp.ne.s32.totalorder %s228, %s229
      %p240 = scmp.eq.s32.totalorder %s27, 0
      %p241 = por %p239, %p240
      %p242 = scmp.ne.s32.totalorder %s228, %s229
      %p243 = scmp.eq.s32.totalorder %s28, 7
      %p244 = por %p242, %p243
      %p246 = scmp.ne.s32.totalorder %s229, %s245
      %p247 = scmp.eq.s32.totalorder %s28, 0
      %p248 = por %p246, %p247
      %s250 = sadd.s32 %s249, 1
      %p253 = scmp.eq.s32.totalorder %s22, 7
      %p254 = scmp.ne.s32.totalorder %s249, %s251
      %p255 = scmp.eq.s32.totalorder %s22, 0
      %p256 = por %p254, %p255
      %p257 = scmp.ne.s32.totalorder %s249, %s251
      %p258 = scmp.eq.s32.totalorder %s27, 7
      %p259 = por %p257, %p258
      %p260 = scmp.ne.s32.totalorder %s251, %s252
      %p261 = scmp.eq.s32.totalorder %s27, 0
      %p262 = por %p260, %p261
      %p263 = scmp.ne.s32.totalorder %s251, %s252
      %p264 = scmp.eq.s32.totalorder %s28, 7
      %p265 = por %p263, %p264
      %p267 = scmp.ne.s32.totalorder %s252, %s266
      %p268 = scmp.eq.s32.totalorder %s28, 0
      %p269 = por %p267, %p268
      %s271 = sadd.s32 %s270, 1
      %p274 = scmp.eq.s32.totalorder %s22, 7
      %p275 = scmp.ne.s32.totalorder %s270, %s272
      %p276 = scmp.eq.s32.totalorder %s22, 0
      %p277 = por %p275, %p276
      %p278 = scmp.ne.s32.totalorder %s270, %s272
      %p279 = scmp.eq.s32.totalorder %s27, 7
      %p280 = por %p278, %p279
      %p281 = scmp.ne.s32.totalorder %s272, %s273
      %p282 = scmp.eq.s32.totalorder %s27, 0
      %p283 = por %p281, %p282
      %p284 = scmp.ne.s32.totalorder %s272, %s273
      %p285 = scmp.eq.s32.totalorder %s28, 7
      %p286 = por %p284, %p285
      %p288 = scmp.ne.s32.totalorder %s273, %s287
      %p289 = scmp.eq.s32.totalorder %s28, 0
      %p290 = por %p288, %p289
      %s292 = sadd.s32 %s291, 1
      %p295 = scmp.eq.s32.totalorder %s22, 7
      %p296 = scmp.ne.s32.totalorder %s291, %s293
      %p297 = scmp.eq.s32.totalorder %s22, 0
      %p298 = por %p296, %p297
      %p299 = scmp.ne.s32.totalorder %s291, %s293
      %p300 = scmp.eq.s32.totalorder %s27, 7
      %p301 = por %p299, %p300
      %p302 = scmp.ne.s32.totalorder %s293, %s294
      %p303 = scmp.eq.s32.totalorder %s27, 0
      %p304 = por %p302, %p303
      %p305 = scmp.ne.s32.totalorder %s293, %s294
      %p306 = scmp.eq.s32.totalorder %s28, 7
      %p307 = por %p305, %p306
      %p309 = scmp.ne.s32.totalorder %s294, %s308
      %p310 = scmp.eq.s32.totalorder %s28, 0
      %p311 = por %p309, %p310
      %s313 = sadd.s32 %s312, 1
      %p316 = scmp.eq.s32.totalorder %s22, 7
      %p317 = scmp.ne.s32.totalorder %s312, %s314
      %p318 = scmp.eq.s32.totalorder %s22, 0
      %p319 = por %p317, %p318
      %p320 = scmp.ne.s32.totalorder %s312, %s314
      %p321 = scmp.eq.s32.totalorder %s27, 7
      %p322 = por %p320, %p321
      %p323 = scmp.ne.s32.totalorder %s314, %s315
      %p324 = scmp.eq.s32.totalorder %s27, 0
      %p325 = por %p323, %p324
      %p326 = scmp.ne.s32.totalorder %s314, %s315
      %p327 = scmp.eq.s32.totalorder %s28, 7
      %p328 = por %p326, %p327
      %p330 = scmp.ne.s32.totalorder %s315, %s329
      %p331 = scmp.eq.s32.totalorder %s28, 0
      %p332 = por %p330, %p331
      %s334 = sadd.s32 %s333, 1
      %p337 = scmp.eq.s32.totalorder %s22, 7
      %p338 = scmp.ne.s32.totalorder %s333, %s335
      %p339 = scmp.eq.s32.totalorder %s22, 0
      %p340 = por %p338, %p339
      %p341 = scmp.ne.s32.totalorder %s333, %s335
      %p342 = scmp.eq.s32.totalorder %s27, 7
      %p343 = por %p341, %p342
      %p344 = scmp.ne.s32.totalorder %s335, %s336
      %p345 = scmp.eq.s32.totalorder %s27, 0
      %p346 = por %p344, %p345
      %p347 = scmp.ne.s32.totalorder %s335, %s336
      %p348 = scmp.eq.s32.totalorder %s28, 7
      %p349 = por %p347, %p348
      %p351 = scmp.ne.s32.totalorder %s336, %s350
      %p352 = scmp.eq.s32.totalorder %s28, 0
      %p353 = por %p351, %p352
      %s354 = ssub.s32 %s29, %s48
      %s355 = ssub.s32 %s30, %s44
      %s356 = sor.u32 %s354, %s355
      %p357 = scmp.eq.s32.totalorder %s356, 0
      %s359 = sadd.s32 %s358, 1
      %s360 = scalar_select %p357, %s358, %s359
      %p363 = pneg %p357
      %p364 = scmp.eq.s32.totalorder %s22, 7
      %p365 = por %p363, %p364
      %p366 = scmp.ne.s32.totalorder %s358, %s361
      %p367 = scmp.eq.s32.totalorder %s22, 0
      %p368 = por %p366, %p367
      %p369 = scmp.ne.s32.totalorder %s358, %s361
      %p370 = scmp.eq.s32.totalorder %s27, 7
      %p371 = por %p369, %p370
      %p372 = scmp.ne.s32.totalorder %s361, %s362
      %p373 = scmp.eq.s32.totalorder %s27, 0
      %p374 = por %p372, %p373
      %p375 = scmp.ne.s32.totalorder %s361, %s362
      %p376 = scmp.eq.s32.totalorder %s28, 7
      %p377 = por %p375, %p376
      %p379 = scmp.ne.s32.totalorder %s362, %s378
      %p380 = scmp.eq.s32.totalorder %s28, 0
      %p381 = por %p379, %p380
      %p382 = scmp.le.s32.totalorder 1, %s22
      %p383 = scmp.lt.s32.totalorder %s22, 9
      %p384 = pnand %p382, %p383
      %p385 = pneg %p384
      // Predicated region
      $region9: #{tpu_custom_call.1} parent=5 // pred_check
        _
      $region10: #{tpu_custom_call.1} parent=5 // pred_check_branch
        %387 = sbr.rel (%p384) target = $region12
      $region11: #{tpu_custom_call.1} parent=5 // pred_region
        %s388 = ssub.s32 %s22, 1
        // Predicated region
        $region13: #{tpu_custom_call.1} parent=11 // pred_check
          %p389 = pneg %p142
        $region14: #{tpu_custom_call.1} parent=11 // pred_check_branch
          %391 = sbr.rel (%p389) target = $region16
        $region15: #{tpu_custom_call.1} parent=11 // pred_region
          _
        $region16: #{tpu_custom_call.1} parent=11 // pred_fallthru
          _
        // Predicated region
        $region17: #{tpu_custom_call.1} parent=11 // pred_check
          %p392 = pneg %p163
        $region18: #{tpu_custom_call.1} parent=11 // pred_check_branch
          %394 = sbr.rel (%p392) target = $region20
        $region19: #{tpu_custom_call.1} parent=11 // pred_region
          _
        $region20: #{tpu_custom_call.1} parent=11 // pred_fallthru
          _
        // Predicated region
        $region21: #{tpu_custom_call.1} parent=11 // pred_check
          %p395 = pneg %p262
        $region22: #{tpu_custom_call.1} parent=11 // pred_check_branch
          %397 = sbr.rel (%p395) target = $region24
        $region23: #{tpu_custom_call.1} parent=11 // pred_region
          _
        $region24: #{tpu_custom_call.1} parent=11 // pred_fallthru
          _
        // Predicated region
        $region25: #{tpu_custom_call.1} parent=11 // pred_check
          %p398 = pneg %p283
        $region26: #{tpu_custom_call.1} parent=11 // pred_check_branch
          %400 = sbr.rel (%p398) target = $region28
        $region27: #{tpu_custom_call.1} parent=11 // pred_region
          _
        $region28: #{tpu_custom_call.1} parent=11 // pred_fallthru
          _
        // Predicated region
        $region29: #{tpu_custom_call.1} parent=11 // pred_check
          %p401 = pneg %p304
        $region30: #{tpu_custom_call.1} parent=11 // pred_check_branch
          %403 = sbr.rel (%p401) target = $region32
        $region31: #{tpu_custom_call.1} parent=11 // pred_region
          _
        $region32: #{tpu_custom_call.1} parent=11 // pred_fallthru
          _
        // Predicated region
        $region33: #{tpu_custom_call.1} parent=11 // pred_check
          %p404 = pneg %p325
        $region34: #{tpu_custom_call.1} parent=11 // pred_check_branch
          %406 = sbr.rel (%p404) target = $region36
        $region35: #{tpu_custom_call.1} parent=11 // pred_region
          _
        $region36: #{tpu_custom_call.1} parent=11 // pred_fallthru
          _
        // Predicated region
        $region37: #{tpu_custom_call.1} parent=11 // pred_check
          %p407 = pneg %p346
        $region38: #{tpu_custom_call.1} parent=11 // pred_check_branch
          %409 = sbr.rel (%p407) target = $region40
        $region39: #{tpu_custom_call.1} parent=11 // pred_region
          _
        $region40: #{tpu_custom_call.1} parent=11 // pred_fallthru
          _
      $region12: #{tpu_custom_call.1} parent=5 // pred_fallthru
        _
      %p410 = scmp.lt.s32.totalorder %s22, 8
      // Predicated region
      $region41: #{tpu_custom_call.1} parent=5 // pred_check
        %p411 = pneg %p410
      $region42: #{tpu_custom_call.1} parent=5 // pred_check_branch
        %413 = sbr.rel (%p411) target = $region44
      $region43: #{tpu_custom_call.1} parent=5 // pred_region
        // Predicated region
        $region45: #{tpu_custom_call.1} parent=43 // pred_check
          %p414 = pneg %p63
        $region46: #{tpu_custom_call.1} parent=43 // pred_check_branch
          %416 = sbr.rel (%p414) target = $region48
        $region47: #{tpu_custom_call.1} parent=43 // pred_region
          %p417 = scmp.lt.s32.totalorder %s29, 1
          %s418 = scalar_select %p417, %s29, 1
          %p419 = scmp.lt.s32.totalorder %s30, 1
          %s420 = scalar_select %p419, %s30, 1
          %s421 = smul.addr %s418, 2
          %s422 = sadd.s32 %s420, %s421
          %s423 = smul.addr %s422, 8
          %s424 = scalar_lea.vmem %s0, %s423
        $region48: #{tpu_custom_call.1} parent=43 // pred_fallthru
          _
        // Predicated region
        $region49: #{tpu_custom_call.1} parent=43 // pred_check
          %p425 = pneg %p89
        $region50: #{tpu_custom_call.1} parent=43 // pred_check_branch
          %427 = sbr.rel (%p425) target = $region52
        $region51: #{tpu_custom_call.1} parent=43 // pred_region
          %p428 = scmp.lt.s32.totalorder %s29, 1
          %s429 = scalar_select %p428, %s29, 1
          %s430 = smul.addr %s429, 8
          %s431 = smul.addr %s430, 8
          %s432 = scalar_lea.vmem %s1, %s431
        $region52: #{tpu_custom_call.1} parent=43 // pred_fallthru
          _
        // Predicated region
        $region53: #{tpu_custom_call.1} parent=43 // pred_check
          %p433 = pneg %p115
        $region54: #{tpu_custom_call.1} parent=43 // pred_check_branch
          %435 = sbr.rel (%p433) target = $region56
        $region55: #{tpu_custom_call.1} parent=43 // pred_region
          %p436 = scmp.lt.s32.totalorder %s29, 1
          %s437 = scalar_select %p436, %s29, 1
          %s438 = smul.addr %s437, 8
          %s439 = smul.addr %s438, 8
          %s440 = scalar_lea.vmem %s2, %s439
        $region56: #{tpu_custom_call.1} parent=43 // pred_fallthru
          _
        // Predicated region
        $region57: #{tpu_custom_call.1} parent=43 // pred_check
          %p441 = pneg %p183
        $region58: #{tpu_custom_call.1} parent=43 // pred_check_branch
          %443 = sbr.rel (%p441) target = $region60
        $region59: #{tpu_custom_call.1} parent=43 // pred_region
          %s444 = sand.u32 %s173, 1
          %s445 = sand.u32 %s173, 1
          %s446 = smul.addr %s445, 32
          %s447 = scalar_lea.vmem [#allocation5], %s446
          %s448 = smul.addr %s31, 8
          %s449 = scalar_lea.vmem %s5, %s448
          // Predicated region
          $region61: #{tpu_custom_call.1} parent=59 // pred_check
            _
          $region62: #{tpu_custom_call.1} parent=59 // pred_check_branch
            %451 = sbr.rel (0) target = $region64
          $region63: #{tpu_custom_call.1} parent=59 // pred_region
            // Predicated region
            $region65: #{tpu_custom_call.1} parent=63 // pred_check
              _
            $region66: #{tpu_custom_call.1} parent=63 // pred_check_branch
              %453 = sbr.rel (0) target = $region68
            $region67: #{tpu_custom_call.1} parent=63 // pred_region
              // Predicated region
              $region80: #{tpu_custom_call.1} parent=67 // pred_check
                _
              $region81: #{tpu_custom_call.1} parent=67 // pred_check_branch
                %474 = sbr.rel (0) target = $region83
              $region82: #{tpu_custom_call.1} parent=67 // pred_region
                loop: start=0, step=1, limit=1
                $region84: #{tpu_custom_call.1} parent=82 // loop_pre_header
                  _
                $region85: #{tpu_custom_call.1} parent=82 // loop_header
                  %s476 = sphi 0, %s480
                  %p477 = scmp.ge.s32.totalorder %s476, 1
                  %s481 = sphi %s449, %s449
                  %s482 = sphi %s447, %s447
                $region86: #{tpu_custom_call.1} parent=82 // loop_header_branch
                  %479 = sbr.rel (%p477) target = $region90
                $region87: #{tpu_custom_call.1} parent=82 // loop_body
                  %v483 = vld [vmem:[%s481] sm:$0xff]
                  %484 = vst [vmem:[%s482] sm:$0xff] %v483
                  %v485 = vld [vmem:[%s481 + $0x10] sm:$0xff]
                  %486 = vst [vmem:[%s482 + $0x8] sm:$0xff] %v485
                  %v487 = vld [vmem:[%s481 + $0x20] sm:$0xff]
                  %488 = vst [vmem:[%s482 + $0x10] sm:$0xff] %v487
                  %v489 = vld [vmem:[%s481 + $0x30] sm:$0xff]
                  %490 = vst [vmem:[%s482 + $0x18] sm:$0xff] %v489
                $region88: #{tpu_custom_call.1} parent=82 // loop_footer
                  %s480 = sadd.s32 1, %s476
                $region89: #{tpu_custom_call.1} parent=82 // loop_footer_branch
                  %475 = sbr.rel target = $region85
                $region90: #{tpu_custom_call.1} parent=82 // loop_exit
                  _
              $region83: #{tpu_custom_call.1} parent=67 // pred_fallthru
                _
              // Predicated region
              $region91: #{tpu_custom_call.1} parent=67 // pred_check
                _
              $region92: #{tpu_custom_call.1} parent=67 // pred_check_branch
                %492 = sbr.rel target = $region94
              $region93: #{tpu_custom_call.1} parent=67 // pred_region
                _
              $region94: #{tpu_custom_call.1} parent=67 // pred_fallthru
                _
            $region68: #{tpu_custom_call.1} parent=63 // pred_fallthru
              _
            // Predicated region
            $region69: #{tpu_custom_call.1} parent=63 // pred_check
              _
            $region70: #{tpu_custom_call.1} parent=63 // pred_check_branch
              %455 = sbr.rel target = $region72
            $region71: #{tpu_custom_call.1} parent=63 // pred_region
              loop: start=0, step=1, limit=1
              $region73: #{tpu_custom_call.1} parent=71 // loop_pre_header
                _
              $region74: #{tpu_custom_call.1} parent=71 // loop_header
                %s458 = sphi 0, %s462
                %p459 = scmp.ge.s32.totalorder %s458, 1
                %s463 = sphi %s449, %s449
                %s464 = sphi %s447, %s447
              $region75: #{tpu_custom_call.1} parent=71 // loop_header_branch
                %461 = sbr.rel (%p459) target = $region79
              $region76: #{tpu_custom_call.1} parent=71 // loop_body
                %v465 = vld [vmem:[%s463] sm:$0xff]
                %466 = vst [vmem:[%s464] sm:$0xff] %v465
                %v467 = vld [vmem:[%s463 + $0x10] sm:$0xff]
                %468 = vst [vmem:[%s464 + $0x8] sm:$0xff] %v467
                %v469 = vld [vmem:[%s463 + $0x20] sm:$0xff]
                %470 = vst [vmem:[%s464 + $0x10] sm:$0xff] %v469
                %v471 = vld [vmem:[%s463 + $0x30] sm:$0xff]
                %472 = vst [vmem:[%s464 + $0x18] sm:$0xff] %v471
              $region77: #{tpu_custom_call.1} parent=71 // loop_footer
                %s462 = sadd.s32 1, %s458
              $region78: #{tpu_custom_call.1} parent=71 // loop_footer_branch
                %457 = sbr.rel target = $region74
              $region79: #{tpu_custom_call.1} parent=71 // loop_exit
                _
            $region72: #{tpu_custom_call.1} parent=63 // pred_fallthru
              _
          $region64: #{tpu_custom_call.1} parent=59 // pred_fallthru
            _
          %493 = vnop
        $region60: #{tpu_custom_call.1} parent=43 // pred_fallthru
          _
        // Predicated region
        $region95: #{tpu_custom_call.1} parent=43 // pred_check
          %p494 = pneg %p209
        $region96: #{tpu_custom_call.1} parent=43 // pred_check_branch
          %496 = sbr.rel (%p494) target = $region98
        $region97: #{tpu_custom_call.1} parent=43 // pred_region
          %p497 = scmp.lt.s32.totalorder %s31, 1
          %s498 = scalar_select %p497, %s31, 1
          %s499 = scalar_lea.vmem %s6, %s498
        $region98: #{tpu_custom_call.1} parent=43 // pred_fallthru
          _
        // Predicated region
        $region99: #{tpu_custom_call.1} parent=43 // pred_check
          %p500 = pneg %p235
        $region100: #{tpu_custom_call.1} parent=43 // pred_check_branch
          %502 = sbr.rel (%p500) target = $region102
        $region101: #{tpu_custom_call.1} parent=43 // pred_region
          %s503 = smul.u32 16, %s31
          %p504 = scmp.lt.s32.totalorder %s503, 31
          %s505 = scalar_select %p504, %s503, 31
          %s506 = smul.addr %s505, 8
          %s507 = scalar_lea.vmem %s7, %s506
          %s508 = smul.u32 16, %s31
        $region102: #{tpu_custom_call.1} parent=43 // pred_fallthru
          _
      $region44: #{tpu_custom_call.1} parent=5 // pred_fallthru
        _
      %p509 = scmp.le.s32.totalorder 1, %s22
      %p510 = scmp.lt.s32.totalorder %s22, 9
      %p511 = pnand %p509, %p510
      %p512 = pneg %p511
      // Predicated region
      $region103: #{tpu_custom_call.1} parent=5 // pred_check
        _
      $region104: #{tpu_custom_call.1} parent=5 // pred_check_branch
        %514 = sbr.rel (%p511) target = $region106
      $region105: #{tpu_custom_call.1} parent=5 // pred_region
        %s515 = ssub.s32 %s22, 1
        %s516 = sand.u32 %s176, 1
        %s517 = sand.u32 %s176, 1
        %s518 = smul.addr %s517, 32
        %s519 = scalar_lea.vmem [#allocation5], %s518
        // Predicated region
        $region107: #{tpu_custom_call.1} parent=105 // pred_check
          %p520 = pneg %p189
        $region108: #{tpu_custom_call.1} parent=105 // pred_check_branch
          %522 = sbr.rel (%p520) target = $region110
        $region109: #{tpu_custom_call.1} parent=105 // pred_region
          _
        $region110: #{tpu_custom_call.1} parent=105 // pred_fallthru
          _
        %p523 = scmp.lt.s32.totalorder %s32, 1
        %s524 = scalar_select %p523, %s32, 1
        %p525 = scmp.lt.s32.totalorder %s33, 1
        %s526 = scalar_select %p525, %s33, 1
        %s527 = smul.addr %s524, 2
        %s528 = sadd.s32 %s526, %s527
        %s529 = smul.addr %s528, 8
        %s530 = scalar_lea.vmem %s0, %s529
        %p531 = pneg %p69
        %p532 = pneg %p66
        %p533 = scmp.lt.s32.totalorder %s32, 1
        %s534 = scalar_select %p533, %s32, 1
        %s535 = smul.addr %s534, 8
        %s536 = smul.addr %s535, 8
        %s537 = scalar_lea.vmem %s1, %s536
        %p538 = pneg %p95
        %p539 = pneg %p92
        %p540 = scmp.lt.s32.totalorder %s32, 1
        %s541 = scalar_select %p540, %s32, 1
        %s542 = smul.addr %s541, 8
        %s543 = smul.addr %s542, 8
        %s544 = scalar_lea.vmem %s2, %s543
        %p545 = pneg %p121
        %p546 = pneg %p118
        %p547 = pneg %p142
        %p548 = pneg %p139
        %p549 = pneg %p163
        %p550 = pneg %p160
        %s551 = sand.u32 %s176, 1
        %s552 = sand.u32 %s176, 1
        %s553 = smul.addr %s552, 32
        %s554 = scalar_lea.vmem [#allocation5], %s553
        %p555 = pneg %p189
        %p556 = pneg %p186
        %p557 = scmp.lt.s32.totalorder %s34, 1
        %s558 = scalar_select %p557, %s34, 1
        %s559 = scalar_lea.vmem %s6, %s558
        %p560 = pneg %p215
        %p561 = pneg %p212
        %s562 = smul.u32 16, %s34
        %p563 = scmp.lt.s32.totalorder %s562, 31
        %s564 = scalar_select %p563, %s562, 31
        %s565 = smul.addr %s564, 8
        %s566 = scalar_lea.vmem %s7, %s565
        %p567 = pneg %p241
        %p568 = pneg %p238
        %p569 = pneg %p262
        %p570 = pneg %p259
        %p571 = pneg %p283
        %p572 = pneg %p280
        %p573 = pneg %p304
        %p574 = pneg %p301
        %p575 = pneg %p325
        %p576 = pneg %p322
        %p577 = pneg %p346
        %p578 = pneg %p343
        %p579 = pneg %p374
        %p580 = pneg %p371
        %s581 = sand.u32 %s361, 1
        %s582 = scalar_lea.sflag [#allocation7], %s581
        %s583 = sand.u32 %s361, 1
        %s584 = smul.addr %s583, 8
        %s585 = scalar_lea.vmem [#allocation6], %s584
        %p586 = scmp.lt.s32.totalorder %s32, 1
        %s587 = scalar_select %p586, %s32, 1
        %p588 = scmp.lt.s32.totalorder %s33, 1
        %s589 = scalar_select %p588, %s33, 1
        %s590 = smul.addr %s587, 2
        %s591 = sadd.s32 %s589, %s590
        %s592 = smul.addr %s591, 8
        %s593 = scalar_lea.vmem %s0, %s592
        %p594 = scmp.lt.s32.totalorder %s32, 1
        %s595 = scalar_select %p594, %s32, 1
        %s596 = smul.addr %s595, 8
        %s597 = smul.addr %s596, 8
        %s598 = scalar_lea.vmem %s1, %s597
        %p599 = scmp.lt.s32.totalorder %s32, 1
        %s600 = scalar_select %p599, %s32, 1
        %s601 = smul.addr %s600, 8
        %s602 = smul.addr %s601, 8
        %s603 = scalar_lea.vmem %s2, %s602
        %p604 = scmp.lt.s32.totalorder %s34, 1
        %s605 = scalar_select %p604, %s34, 1
        %s606 = scalar_lea.vmem %s6, %s605
        %s607 = smul.u32 16, %s34
        %p608 = scmp.lt.s32.totalorder %s607, 31
        %s609 = scalar_select %p608, %s607, 31
        %s610 = smul.addr %s609, 8
        %s611 = scalar_lea.vmem %s7, %s610
        %s612 = smul.u32 16, %s34
        %p613 = scmp.eq.s32.totalorder %s34, 0
        // Predicated region
        $region111: #{tpu_custom_call.1} parent=105 // pred_check
          %p614 = pneg %p613
        $region112: #{tpu_custom_call.1} parent=105 // pred_check_branch
          %616 = sbr.rel (%p614) target = $region114
        $region113: #{tpu_custom_call.1} parent=105 // pred_region
          %v617 = vld [vmem:[%s593] sm:$0xff]
          %v618 = vld [vmem:[%s3] sm:$0xff]
          %v619 = vld [vmem:[%s3 + $0x8] sm:$0xff]
          %v620 = vld [vmem:[%s3 + $0x10] sm:$0xff]
          %v621 = vld [vmem:[%s3 + $0x18] sm:$0xff]
          %vm622 = vcmask 261120
          %v624 = vsel %vm622, %v617, 0
          %626 = vmatprep.subr.mxu0 0.0
          %627 = vmatpush1.msra.mxu0 %v618
          %628 = vmatprep.subr.mxu0 0.0
          %629 = vmatpush1.msra.mxu0 %v619
          %630 = vmatprep.subr.mxu0 0.0
          %631 = vmatpush1.msra.mxu0 %v620
          %632 = vmatprep.subr.mxu0 0.0
          %633 = vmatpush1.msra.mxu0 %v621
          %634 = vmatprep.subr.mxu0 0.0
          %635 = vmatpush1.msra.mxu0 0.0
          %636 = vmatprep.subr.mxu0 0.0
          %637 = vmatpush1.msra.mxu0 0.0
          %638 = vmatprep.subr.mxu0 0.0
          %639 = vmatpush1.msra.mxu0 0.0
          %640 = vmatprep.subr.mxu0 0.0
          %641 = vmatpush1.msra.mxu0 0.0
          %642 = vmatprep.subr.mxu0 0.0
          %643 = vmatpush1.msra.mxu0 0.0
          %644 = vmatprep.subr.mxu0 0.0
          %645 = vmatpush1.msra.mxu0 0.0
          %646 = vmatprep.subr.mxu0 0.0
          %647 = vmatpush1.msra.mxu0 0.0
          %648 = vmatprep.subr.mxu0 0.0
          %649 = vmatpush1.msra.mxu0 0.0
          %650 = vmatprep.subr.mxu0 0.0
          %651 = vmatpush1.msra.mxu0 0.0
          %652 = vmatprep.subr.mxu0 0.0
          %653 = vmatpush1.msra.mxu0 0.0
          %654 = vmatprep.subr.mxu0 0.0
          %655 = vmatpush1.msra.mxu0 0.0
          %656 = vmatprep.subr.mxu0 0.0
          %657 = vmatpush1.msra.mxu0 0.0
          %658 = vmatprep.subr.mxu0 0.0
          %659 = vmatpush1.msra.mxu0 0.0
          %660 = vmatprep.subr.mxu0 0.0
          %661 = vmatpush1.msra.mxu0 0.0
          %662 = vmatprep.subr.mxu0 0.0
          %663 = vmatpush1.msra.mxu0 0.0
          %664 = vmatprep.subr.mxu0 0.0
          %665 = vmatpush1.msra.mxu0 0.0
          %666 = vmatprep.subr.mxu0 0.0
          %667 = vmatpush1.msra.mxu0 0.0
          %668 = vmatprep.subr.mxu0 0.0
          %669 = vmatpush1.msra.mxu0 0.0
          %670 = vmatprep.subr.mxu0 0.0
          %671 = vmatpush1.msra.mxu0 0.0
          %672 = vmatprep.subr.mxu0 0.0
          %673 = vmatpush1.msra.mxu0 0.0
          %674 = vmatprep.subr.mxu0 0.0
          %675 = vmatpush1.msra.mxu0 0.0
          %676 = vmatprep.subr.mxu0 0.0
          %677 = vmatpush1.msra.mxu0 0.0
          %678 = vmatprep.subr.mxu0 0.0
          %679 = vmatpush1.msra.mxu0 0.0
          %680 = vmatprep.subr.mxu0 0.0
          %681 = vmatpush1.msra.mxu0 0.0
          %682 = vmatprep.subr.mxu0 0.0
          %683 = vmatpush1.msra.mxu0 0.0
          %684 = vmatprep.subr.mxu0 0.0
          %685 = vmatpush1.msra.mxu0 0.0
          %686 = vmatprep.subr.mxu0 0.0
          %687 = vmatpush1.msra.mxu0 0.0
          %688 = vmatprep.subr.mxu0 0.0
          %689 = vmatpush1.msra.mxu0 0.0
          %690 = vmatprep.mubr.f32.mxu0 0.0
          %691 = vmatmul.mubr.f32.gmra.mrb[0].mxu0 %v624
          %v692 = vpop.f32.mrb[0].mxu0
          %v693 = vadd.f32 0.0, %v692
          %v694 = vpop.f32.mrb[0].mxu0
          %695 = vdwg.mxu0
          %697 = vrot.lane.b32.xlu0 %v693, 120
          %v698 = vpop.permute.xlu0 %697
          %700 = vrot.lane.b32.xlu0 %v693, 112
          %v701 = vpop.permute.xlu0 %700
          %703 = vrot.lane.b32.xlu0 %v693, 104
          %v704 = vpop.permute.xlu0 %703
          %v706 = vcombine.low %v693, %v701
          %v707 = vcombine.high %v693, %v701
          %v709 = vunpack.c.l.s4 1983009808
          %v710 = vunpack.c.0.s8 %v709
          %v711 = vlaneseq
          %v712 = vshrl.u32 %v711, 7
          %v713 = vsub.s32 %v710, %v712
          %v714 = vrot.slane %v706, %v713
          %v716 = vunpack.c.l.s4 1983009808
          %v717 = vunpack.c.0.s8 %v716
          %v718 = vlaneseq
          %v719 = vshrl.u32 %v718, 7
          %v720 = vsub.s32 %v717, %v719
          %v721 = vrot.slane %v707, %v720
          %v722 = vcombine.low %v698, %v704
          %v723 = vcombine.high %v698, %v704
          %v725 = vunpack.c.l.s4 1983009808
          %v726 = vunpack.c.0.s8 %v725
          %v727 = vlaneseq
          %v728 = vshrl.u32 %v727, 7
          %v729 = vsub.s32 %v726, %v728
          %v730 = vrot.slane %v722, %v729
          %v732 = vunpack.c.l.s4 1983009808
          %v733 = vunpack.c.0.s8 %v732
          %v734 = vlaneseq
          %v735 = vshrl.u32 %v734, 7
          %v736 = vsub.s32 %v733, %v735
          %v737 = vrot.slane %v723, %v736
          %v738 = vcombine.low %v714, %v730
          %v739 = vcombine.high %v714, %v730
          %v741 = vunpack.c.l.s4 1934713408
          %v742 = vunpack.c.0.s8 %v741
          %v743 = vlaneseq
          %v744 = vshrl.u32 %v743, 7
          %v745 = vsub.s32 %v742, %v744
          %v746 = vrot.slane %v738, %v745
          %v748 = vunpack.c.l.s4 1934713408
          %v749 = vunpack.c.0.s8 %v748
          %v750 = vlaneseq
          %v751 = vshrl.u32 %v750, 7
          %v752 = vsub.s32 %v749, %v751
          %v753 = vrot.slane %v739, %v752
          %v754 = vcombine.low %v721, %v737
          %v755 = vcombine.high %v721, %v737
          %v757 = vunpack.c.l.s4 1934713408
          %v758 = vunpack.c.0.s8 %v757
          %v759 = vlaneseq
          %v760 = vshrl.u32 %v759, 7
          %v761 = vsub.s32 %v758, %v760
          %v762 = vrot.slane %v754, %v761
          %v764 = vunpack.c.l.s4 1934713408
          %v765 = vunpack.c.0.s8 %v764
          %v766 = vlaneseq
          %v767 = vshrl.u32 %v766, 7
          %v768 = vsub.s32 %v765, %v767
          %v769 = vrot.slane %v755, %v768
          %v770 = vcombine.high %v746, 0.0
          %v771 = vcombine.high %v753, 0.0
          %v772 = vcombine.high %v762, 0.0
          %v773 = vcombine.high %v769, 0.0
          %v774 = vcombine.low %v746, %v753
          %v776 = vunpack.c.l.s4 1983009808
          %v777 = vunpack.c.0.s8 %v776
          %v778 = vlaneseq
          %v779 = vshrl.u32 %v778, 7
          %v780 = vsub.s32 %v777, %v779
          %v781 = vrot.slane %v774, %v780
          %v782 = vcombine.low %v770, %v771
          %v784 = vunpack.c.l.s4 1983009808
          %v785 = vunpack.c.0.s8 %v784
          %v786 = vlaneseq
          %v787 = vshrl.u32 %v786, 7
          %v788 = vsub.s32 %v785, %v787
          %v789 = vrot.slane %v782, %v788
          %v790 = vcombine.low %v762, %v769
          %v792 = vunpack.c.l.s4 1983009808
          %v793 = vunpack.c.0.s8 %v792
          %v794 = vlaneseq
          %v795 = vshrl.u32 %v794, 7
          %v796 = vsub.s32 %v793, %v795
          %v797 = vrot.slane %v790, %v796
          %v798 = vcombine.low %v772, %v773
          %v800 = vunpack.c.l.s4 1983009808
          %v801 = vunpack.c.0.s8 %v800
          %v802 = vlaneseq
          %v803 = vshrl.u32 %v802, 7
          %v804 = vsub.s32 %v801, %v803
          %v805 = vrot.slane %v798, %v804
          %v806 = vcombine.low %v781, %v789
          %v807 = vcombine.high %v781, %v789
          %v809 = vunpack.c.l.s4 1934713408
          %v810 = vunpack.c.0.s8 %v809
          %v811 = vlaneseq
          %v812 = vshrl.u32 %v811, 7
          %v813 = vsub.s32 %v810, %v812
          %v814 = vrot.slane %v806, %v813
          %v816 = vunpack.c.l.s4 1934713408
          %v817 = vunpack.c.0.s8 %v816
          %v818 = vlaneseq
          %v819 = vshrl.u32 %v818, 7
          %v820 = vsub.s32 %v817, %v819
          %v821 = vrot.slane %v807, %v820
          %v822 = vcombine.low %v797, %v805
          %v823 = vcombine.high %v797, %v805
          %v825 = vunpack.c.l.s4 1934713408
          %v826 = vunpack.c.0.s8 %v825
          %v827 = vlaneseq
          %v828 = vshrl.u32 %v827, 7
          %v829 = vsub.s32 %v826, %v828
          %v830 = vrot.slane %v822, %v829
          %v832 = vunpack.c.l.s4 1934713408
          %v833 = vunpack.c.0.s8 %v832
          %v834 = vlaneseq
          %v835 = vshrl.u32 %v834, 7
          %v836 = vsub.s32 %v833, %v835
          %v837 = vrot.slane %v823, %v836
          %v838 = vcombine.low %v814, %v830
          %v839 = vcombine.high %v814, %v830
          %v840 = vcombine.low %v821, %v837
          %v841 = vcombine.high %v821, %v837
          %v842 = vld [vmem:[%s598] sm:$0xff]
          %v843 = vld [vmem:[%s598 + $0x8] sm:$0xff]
          %v844 = vld [vmem:[%s598 + $0x10] sm:$0xff]
          %v845 = vld [vmem:[%s598 + $0x18] sm:$0xff]
          %v846 = vld [vmem:[%s598 + $0x20] sm:$0xff]
          %v847 = vld [vmem:[%s598 + $0x28] sm:$0xff]
          %v848 = vld [vmem:[%s598 + $0x30] sm:$0xff]
          %v849 = vld [vmem:[%s598 + $0x38] sm:$0xff]
          %v850 = vld [vmem:[%s603] sm:$0xff]
          %v851 = vld [vmem:[%s603 + $0x8] sm:$0xff]
          %v852 = vld [vmem:[%s603 + $0x10] sm:$0xff]
          %v853 = vld [vmem:[%s603 + $0x18] sm:$0xff]
          %v854 = vld [vmem:[%s603 + $0x20] sm:$0xff]
          %v855 = vld [vmem:[%s603 + $0x28] sm:$0xff]
          %v856 = vld [vmem:[%s603 + $0x30] sm:$0xff]
          %v857 = vld [vmem:[%s603 + $0x38] sm:$0xff]
          %vm858 = vcmask 64512
          %v860 = vsel %vm858, %v838, 0
          %v863 = vsel %vm858, %v842, 0
          %v866 = vsel %vm858, %v843, 0
          %868 = vmatprep.subr.mxu0 0.0
          %869 = vmatpush1.xpose.msra.mxu0 %v863
          %870 = vmatprep.subr.mxu0 0.0
          %871 = vmatpush1.xpose.msra.mxu0 %v866
          %872 = vmatprep.subr.mxu0 0.0
          %873 = vmatpush1.xpose.msra.mxu0 0.0
          %874 = vmatprep.subr.mxu0 0.0
          %875 = vmatpush1.xpose.msra.mxu0 0.0
          %876 = vmatprep.subr.mxu0 0.0
          %877 = vmatpush1.xpose.msra.mxu0 0.0
          %878 = vmatprep.subr.mxu0 0.0
          %879 = vmatpush1.xpose.msra.mxu0 0.0
          %880 = vmatprep.subr.mxu0 0.0
          %881 = vmatpush1.xpose.msra.mxu0 0.0
          %882 = vmatprep.subr.mxu0 0.0
          %883 = vmatpush1.xpose.msra.mxu0 0.0
          %884 = vmatprep.subr.mxu0 0.0
          %885 = vmatpush1.xpose.msra.mxu0 0.0
          %886 = vmatprep.subr.mxu0 0.0
          %887 = vmatpush1.xpose.msra.mxu0 0.0
          %888 = vmatprep.subr.mxu0 0.0
          %889 = vmatpush1.xpose.msra.mxu0 0.0
          %890 = vmatprep.subr.mxu0 0.0
          %891 = vmatpush1.xpose.msra.mxu0 0.0
          %892 = vmatprep.subr.mxu0 0.0
          %893 = vmatpush1.xpose.msra.mxu0 0.0
          %894 = vmatprep.subr.mxu0 0.0
          %895 = vmatpush1.xpose.msra.mxu0 0.0
          %896 = vmatprep.subr.mxu0 0.0
          %897 = vmatpush1.xpose.msra.mxu0 0.0
          %898 = vmatprep.subr.mxu0 0.0
          %899 = vmatpush1.xpose.msra.mxu0 0.0
          %900 = vmatprep.subr.mxu0 0.0
          %901 = vmatpush1.xpose.msra.mxu0 0.0
          %902 = vmatprep.subr.mxu0 0.0
          %903 = vmatpush1.xpose.msra.mxu0 0.0
          %904 = vmatprep.subr.mxu0 0.0
          %905 = vmatpush1.xpose.msra.mxu0 0.0
          %906 = vmatprep.subr.mxu0 0.0
          %907 = vmatpush1.xpose.msra.mxu0 0.0
          %908 = vmatprep.subr.mxu0 0.0
          %909 = vmatpush1.xpose.msra.mxu0 0.0
          %910 = vmatprep.subr.mxu0 0.0
          %911 = vmatpush1.xpose.msra.mxu0 0.0
          %912 = vmatprep.subr.mxu0 0.0
          %913 = vmatpush1.xpose.msra.mxu0 0.0
          %914 = vmatprep.subr.mxu0 0.0
          %915 = vmatpush1.xpose.msra.mxu0 0.0
          %916 = vmatprep.subr.mxu0 0.0
          %917 = vmatpush1.xpose.msra.mxu0 0.0
          %918 = vmatprep.subr.mxu0 0.0
          %919 = vmatpush1.xpose.msra.mxu0 0.0
          %920 = vmatprep.subr.mxu0 0.0
          %921 = vmatpush1.xpose.msra.mxu0 0.0
          %922 = vmatprep.subr.mxu0 0.0
          %923 = vmatpush1.xpose.msra.mxu0 0.0
          %924 = vmatprep.subr.mxu0 0.0
          %925 = vmatpush1.xpose.msra.mxu0 0.0
          %926 = vmatprep.subr.mxu0 0.0
          %927 = vmatpush1.xpose.msra.mxu0 0.0
          %928 = vmatprep.subr.mxu0 0.0
          %929 = vmatpush1.xpose.msra.mxu0 0.0
          %930 = vmatprep.subr.mxu0 0.0
          %931 = vmatpush1.xpose.msra.mxu0 0.0
          %932 = vmatprep.mubr.f32.mxu0 0.0
          %933 = vmatmul.mubr.f32.gmra.mrb[0].mxu0 %v860
          %v934 = vpop.f32.mrb[0].mxu0
          %v935 = vadd.f32 0.0, %v934
          %v936 = vpop.f32.mrb[0].mxu0
          %937 = vdwg.mxu0
          %v939 = vsel %vm858, %v839, 0
          %v942 = vsel %vm858, %v844, 0
          %v945 = vsel %vm858, %v845, 0
          %947 = vmatprep.subr.mxu0 0.0
          %948 = vmatpush1.xpose.msra.mxu0 %v942
          %949 = vmatprep.subr.mxu0 0.0
          %950 = vmatpush1.xpose.msra.mxu0 %v945
          %951 = vmatprep.subr.mxu0 0.0
          %952 = vmatpush1.xpose.msra.mxu0 0.0
          %953 = vmatprep.subr.mxu0 0.0
          %954 = vmatpush1.xpose.msra.mxu0 0.0
          %955 = vmatprep.subr.mxu0 0.0
          %956 = vmatpush1.xpose.msra.mxu0 0.0
          %957 = vmatprep.subr.mxu0 0.0
          %958 = vmatpush1.xpose.msra.mxu0 0.0
          %959 = vmatprep.subr.mxu0 0.0
          %960 = vmatpush1.xpose.msra.mxu0 0.0
          %961 = vmatprep.subr.mxu0 0.0
          %962 = vmatpush1.xpose.msra.mxu0 0.0
          %963 = vmatprep.subr.mxu0 0.0
          %964 = vmatpush1.xpose.msra.mxu0 0.0
          %965 = vmatprep.subr.mxu0 0.0
          %966 = vmatpush1.xpose.msra.mxu0 0.0
          %967 = vmatprep.subr.mxu0 0.0
          %968 = vmatpush1.xpose.msra.mxu0 0.0
          %969 = vmatprep.subr.mxu0 0.0
          %970 = vmatpush1.xpose.msra.mxu0 0.0
          %971 = vmatprep.subr.mxu0 0.0
          %972 = vmatpush1.xpose.msra.mxu0 0.0
          %973 = vmatprep.subr.mxu0 0.0
          %974 = vmatpush1.xpose.msra.mxu0 0.0
          %975 = vmatprep.subr.mxu0 0.0
          %976 = vmatpush1.xpose.msra.mxu0 0.0
          %977 = vmatprep.subr.mxu0 0.0
          %978 = vmatpush1.xpose.msra.mxu0 0.0
          %979 = vmatprep.subr.mxu0 0.0
          %980 = vmatpush1.xpose.msra.mxu0 0.0
          %981 = vmatprep.subr.mxu0 0.0
          %982 = vmatpush1.xpose.msra.mxu0 0.0
          %983 = vmatprep.subr.mxu0 0.0
          %984 = vmatpush1.xpose.msra.mxu0 0.0
          %985 = vmatprep.subr.mxu0 0.0
          %986 = vmatpush1.xpose.msra.mxu0 0.0
          %987 = vmatprep.subr.mxu0 0.0
          %988 = vmatpush1.xpose.msra.mxu0 0.0
          %989 = vmatprep.subr.mxu0 0.0
          %990 = vmatpush1.xpose.msra.mxu0 0.0
          %991 = vmatprep.subr.mxu0 0.0
          %992 = vmatpush1.xpose.msra.mxu0 0.0
          %993 = vmatprep.subr.mxu0 0.0
          %994 = vmatpush1.xpose.msra.mxu0 0.0
          %995 = vmatprep.subr.mxu0 0.0
          %996 = vmatpush1.xpose.msra.mxu0 0.0
          %997 = vmatprep.subr.mxu0 0.0
          %998 = vmatpush1.xpose.msra.mxu0 0.0
          %999 = vmatprep.subr.mxu0 0.0
          %1000 = vmatpush1.xpose.msra.mxu0 0.0
          %1001 = vmatprep.subr.mxu0 0.0
          %1002 = vmatpush1.xpose.msra.mxu0 0.0
          %1003 = vmatprep.subr.mxu0 0.0
          %1004 = vmatpush1.xpose.msra.mxu0 0.0
          %1005 = vmatprep.subr.mxu0 0.0
          %1006 = vmatpush1.xpose.msra.mxu0 0.0
          %1007 = vmatprep.subr.mxu0 0.0
          %1008 = vmatpush1.xpose.msra.mxu0 0.0
          %1009 = vmatprep.subr.mxu0 0.0
          %1010 = vmatpush1.xpose.msra.mxu0 0.0
          %1011 = vmatprep.mubr.f32.mxu0 0.0
          %1012 = vmatmul.mubr.f32.gmra.mrb[0].mxu0 %v939
          %v1013 = vpop.f32.mrb[0].mxu0
          %v1014 = vadd.f32 0.0, %v1013
          %v1015 = vpop.f32.mrb[0].mxu0
          %1016 = vdwg.mxu0
          %v1018 = vsel %vm858, %v840, 0
          %v1021 = vsel %vm858, %v846, 0
          %v1024 = vsel %vm858, %v847, 0
          %1026 = vmatprep.subr.mxu0 0.0
          %1027 = vmatpush1.xpose.msra.mxu0 %v1021
          %1028 = vmatprep.subr.mxu0 0.0
          %1029 = vmatpush1.xpose.msra.mxu0 %v1024
          %1030 = vmatprep.subr.mxu0 0.0
          %1031 = vmatpush1.xpose.msra.mxu0 0.0
          %1032 = vmatprep.subr.mxu0 0.0
          %1033 = vmatpush1.xpose.msra.mxu0 0.0
          %1034 = vmatprep.subr.mxu0 0.0
          %1035 = vmatpush1.xpose.msra.mxu0 0.0
          %1036 = vmatprep.subr.mxu0 0.0
          %1037 = vmatpush1.xpose.msra.mxu0 0.0
          %1038 = vmatprep.subr.mxu0 0.0
          %1039 = vmatpush1.xpose.msra.mxu0 0.0
          %1040 = vmatprep.subr.mxu0 0.0
          %1041 = vmatpush1.xpose.msra.mxu0 0.0
          %1042 = vmatprep.subr.mxu0 0.0
          %1043 = vmatpush1.xpose.msra.mxu0 0.0
          %1044 = vmatprep.subr.mxu0 0.0
          %1045 = vmatpush1.xpose.msra.mxu0 0.0
          %1046 = vmatprep.subr.mxu0 0.0
          %1047 = vmatpush1.xpose.msra.mxu0 0.0
          %1048 = vmatprep.subr.mxu0 0.0
          %1049 = vmatpush1.xpose.msra.mxu0 0.0
          %1050 = vmatprep.subr.mxu0 0.0
          %1051 = vmatpush1.xpose.msra.mxu0 0.0
          %1052 = vmatprep.subr.mxu0 0.0
          %1053 = vmatpush1.xpose.msra.mxu0 0.0
          %1054 = vmatprep.subr.mxu0 0.0
          %1055 = vmatpush1.xpose.msra.mxu0 0.0
          %1056 = vmatprep.subr.mxu0 0.0
          %1057 = vmatpush1.xpose.msra.mxu0 0.0
          %1058 = vmatprep.subr.mxu0 0.0
          %1059 = vmatpush1.xpose.msra.mxu0 0.0
          %1060 = vmatprep.subr.mxu0 0.0
          %1061 = vmatpush1.xpose.msra.mxu0 0.0
          %1062 = vmatprep.subr.mxu0 0.0
          %1063 = vmatpush1.xpose.msra.mxu0 0.0
          %1064 = vmatprep.subr.mxu0 0.0
          %1065 = vmatpush1.xpose.msra.mxu0 0.0
          %1066 = vmatprep.subr.mxu0 0.0
          %1067 = vmatpush1.xpose.msra.mxu0 0.0
          %1068 = vmatprep.subr.mxu0 0.0
          %1069 = vmatpush1.xpose.msra.mxu0 0.0
          %1070 = vmatprep.subr.mxu0 0.0
          %1071 = vmatpush1.xpose.msra.mxu0 0.0
          %1072 = vmatprep.subr.mxu0 0.0
          %1073 = vmatpush1.xpose.msra.mxu0 0.0
          %1074 = vmatprep.subr.mxu0 0.0
          %1075 = vmatpush1.xpose.msra.mxu0 0.0
          %1076 = vmatprep.subr.mxu0 0.0
          %1077 = vmatpush1.xpose.msra.mxu0 0.0
          %1078 = vmatprep.subr.mxu0 0.0
          %1079 = vmatpush1.xpose.msra.mxu0 0.0
          %1080 = vmatprep.subr.mxu0 0.0
          %1081 = vmatpush1.xpose.msra.mxu0 0.0
          %1082 = vmatprep.subr.mxu0 0.0
          %1083 = vmatpush1.xpose.msra.mxu0 0.0
          %1084 = vmatprep.subr.mxu0 0.0
          %1085 = vmatpush1.xpose.msra.mxu0 0.0
          %1086 = vmatprep.subr.mxu0 0.0
          %1087 = vmatpush1.xpose.msra.mxu0 0.0
          %1088 = vmatprep.subr.mxu0 0.0
          %1089 = vmatpush1.xpose.msra.mxu0 0.0
          %1090 = vmatprep.mubr.f32.mxu0 0.0
          %1091 = vmatmul.mubr.f32.gmra.mrb[0].mxu0 %v1018
          %v1092 = vpop.f32.mrb[0].mxu0
          %v1093 = vadd.f32 0.0, %v1092
          %v1094 = vpop.f32.mrb[0].mxu0
          %1095 = vdwg.mxu0
          %v1097 = vsel %vm858, %v841, 0
          %v1100 = vsel %vm858, %v848, 0
          %v1103 = vsel %vm858, %v849, 0
          %1105 = vmatprep.subr.mxu0 0.0
          %1106 = vmatpush1.xpose.msra.mxu0 %v1100
          %1107 = vmatprep.subr.mxu0 0.0
          %1108 = vmatpush1.xpose.msra.mxu0 %v1103
          %1109 = vmatprep.subr.mxu0 0.0
          %1110 = vmatpush1.xpose.msra.mxu0 0.0
          %1111 = vmatprep.subr.mxu0 0.0
          %1112 = vmatpush1.xpose.msra.mxu0 0.0
          %1113 = vmatprep.subr.mxu0 0.0
          %1114 = vmatpush1.xpose.msra.mxu0 0.0
          %1115 = vmatprep.subr.mxu0 0.0
          %1116 = vmatpush1.xpose.msra.mxu0 0.0
          %1117 = vmatprep.subr.mxu0 0.0
          %1118 = vmatpush1.xpose.msra.mxu0 0.0
          %1119 = vmatprep.subr.mxu0 0.0
          %1120 = vmatpush1.xpose.msra.mxu0 0.0
          %1121 = vmatprep.subr.mxu0 0.0
          %1122 = vmatpush1.xpose.msra.mxu0 0.0
          %1123 = vmatprep.subr.mxu0 0.0
          %1124 = vmatpush1.xpose.msra.mxu0 0.0
          %1125 = vmatprep.subr.mxu0 0.0
          %1126 = vmatpush1.xpose.msra.mxu0 0.0
          %1127 = vmatprep.subr.mxu0 0.0
          %1128 = vmatpush1.xpose.msra.mxu0 0.0
          %1129 = vmatprep.subr.mxu0 0.0
          %1130 = vmatpush1.xpose.msra.mxu0 0.0
          %1131 = vmatprep.subr.mxu0 0.0
          %1132 = vmatpush1.xpose.msra.mxu0 0.0
          %1133 = vmatprep.subr.mxu0 0.0
          %1134 = vmatpush1.xpose.msra.mxu0 0.0
          %1135 = vmatprep.subr.mxu0 0.0
          %1136 = vmatpush1.xpose.msra.mxu0 0.0
          %1137 = vmatprep.subr.mxu0 0.0
          %1138 = vmatpush1.xpose.msra.mxu0 0.0
          %1139 = vmatprep.subr.mxu0 0.0
          %1140 = vmatpush1.xpose.msra.mxu0 0.0
          %1141 = vmatprep.subr.mxu0 0.0
          %1142 = vmatpush1.xpose.msra.mxu0 0.0
          %1143 = vmatprep.subr.mxu0 0.0
          %1144 = vmatpush1.xpose.msra.mxu0 0.0
          %1145 = vmatprep.subr.mxu0 0.0
          %1146 = vmatpush1.xpose.msra.mxu0 0.0
          %1147 = vmatprep.subr.mxu0 0.0
          %1148 = vmatpush1.xpose.msra.mxu0 0.0
          %1149 = vmatprep.subr.mxu0 0.0
          %1150 = vmatpush1.xpose.msra.mxu0 0.0
          %1151 = vmatprep.subr.mxu0 0.0
          %1152 = vmatpush1.xpose.msra.mxu0 0.0
          %1153 = vmatprep.subr.mxu0 0.0
          %1154 = vmatpush1.xpose.msra.mxu0 0.0
          %1155 = vmatprep.subr.mxu0 0.0
          %1156 = vmatpush1.xpose.msra.mxu0 0.0
          %1157 = vmatprep.subr.mxu0 0.0
          %1158 = vmatpush1.xpose.msra.mxu0 0.0
          %1159 = vmatprep.subr.mxu0 0.0
          %1160 = vmatpush1.xpose.msra.mxu0 0.0
          %1161 = vmatprep.subr.mxu0 0.0
          %1162 = vmatpush1.xpose.msra.mxu0 0.0
          %1163 = vmatprep.subr.mxu0 0.0
          %1164 = vmatpush1.xpose.msra.mxu0 0.0
          %1165 = vmatprep.subr.mxu0 0.0
          %1166 = vmatpush1.xpose.msra.mxu0 0.0
          %1167 = vmatprep.subr.mxu0 0.0
          %1168 = vmatpush1.xpose.msra.mxu0 0.0
          %1169 = vmatprep.mubr.f32.mxu0 0.0
          %1170 = vmatmul.mubr.f32.gmra.mrb[0].mxu0 %v1097
          %v1171 = vpop.f32.mrb[0].mxu0
          %v1172 = vadd.f32 0.0, %v1171
          %v1173 = vpop.f32.mrb[0].mxu0
          %1174 = vdwg.mxu0
          %vm1175 = vcmask 130048
          %v1176 = vsel %vm1175, %v935, -inf
          %1177 = vmax.xlane.f32.xlu0 %v1176
          %v1178 = vpop.xlane.xlu0 %1177
          %v1179 = vsel %vm1175, %v1014, -inf
          %1180 = vmax.xlane.f32.xlu0 %v1179
          %v1181 = vpop.xlane.xlu0 %1180
          %v1182 = vsel %vm1175, %v1093, -inf
          %1183 = vmax.xlane.f32.xlu0 %v1182
          %v1184 = vpop.xlane.xlu0 %1183
          %v1185 = vsel %vm1175, %v1172, -inf
          %1186 = vmax.xlane.f32.xlu0 %v1185
          %v1187 = vpop.xlane.xlu0 %1186
          %v1188 = vsub.f32 %v935, %v1178
          %v1189 = vsub.f32 %v1014, %v1181
          %v1190 = vsub.f32 %v1093, %v1184
          %v1191 = vsub.f32 %v1172, %v1187
          %v1192 = vmul.f32 %v1188, 1.442695
          %v1193 = vpow.pop %v1192
          %v1194 = vmul.f32 %v1189, 1.442695
          %v1195 = vpow.pop %v1194
          %v1196 = vmul.f32 %v1190, 1.442695
          %v1197 = vpow.pop %v1196
          %v1198 = vmul.f32 %v1191, 1.442695
          %v1199 = vpow.pop %v1198
          %v1200 = vsel %vm1175, %v1193, 0.0
          %1201 = vadd.xlane.f32.xlu0 %v1200
          %v1202 = vpop.xlane.xlu0 %1201
          %v1203 = vsel %vm1175, %v1195, 0.0
          %1204 = vadd.xlane.f32.xlu0 %v1203
          %v1205 = vpop.xlane.xlu0 %1204
          %v1206 = vsel %vm1175, %v1197, 0.0
          %1207 = vadd.xlane.f32.xlu0 %v1206
          %v1208 = vpop.xlane.xlu0 %1207
          %v1209 = vsel %vm1175, %v1199, 0.0
          %1210 = vadd.xlane.f32.xlu0 %v1209
          %v1211 = vpop.xlane.xlu0 %1210
          %v1212 = vrcp.pop %v1202
          %v1213 = vmul.f32 %v1193, %v1212
          %v1214 = vrcp.pop %v1205
          %v1215 = vmul.f32 %v1195, %v1214
          %v1216 = vrcp.pop %v1208
          %v1217 = vmul.f32 %v1197, %v1216
          %v1218 = vrcp.pop %v1211
          %v1219 = vmul.f32 %v1199, %v1218
          %v1221 = vsel %vm1175, %v1213, 0
          %1223 = vmatprep.subr.mxu0 0.0
          %1224 = vmatpush1.msra.mxu0 %v850
          %1225 = vmatprep.subr.mxu0 0.0
          %1226 = vmatpush1.msra.mxu0 %v851
          %1227 = vmatprep.subr.mxu0 0.0
          %1228 = vmatpush1.msra.mxu0 0.0
          %1229 = vmatprep.subr.mxu0 0.0
          %1230 = vmatpush1.msra.mxu0 0.0
          %1231 = vmatprep.subr.mxu0 0.0
          %1232 = vmatpush1.msra.mxu0 0.0
          %1233 = vmatprep.subr.mxu0 0.0
          %1234 = vmatpush1.msra.mxu0 0.0
          %1235 = vmatprep.subr.mxu0 0.0
          %1236 = vmatpush1.msra.mxu0 0.0
          %1237 = vmatprep.subr.mxu0 0.0
          %1238 = vmatpush1.msra.mxu0 0.0
          %1239 = vmatprep.subr.mxu0 0.0
          %1240 = vmatpush1.msra.mxu0 0.0
          %1241 = vmatprep.subr.mxu0 0.0
          %1242 = vmatpush1.msra.mxu0 0.0
          %1243 = vmatprep.subr.mxu0 0.0
          %1244 = vmatpush1.msra.mxu0 0.0
          %1245 = vmatprep.subr.mxu0 0.0
          %1246 = vmatpush1.msra.mxu0 0.0
          %1247 = vmatprep.subr.mxu0 0.0
          %1248 = vmatpush1.msra.mxu0 0.0
          %1249 = vmatprep.subr.mxu0 0.0
          %1250 = vmatpush1.msra.mxu0 0.0
          %1251 = vmatprep.subr.mxu0 0.0
          %1252 = vmatpush1.msra.mxu0 0.0
          %1253 = vmatprep.subr.mxu0 0.0
          %1254 = vmatpush1.msra.mxu0 0.0
          %1255 = vmatprep.subr.mxu0 0.0
          %1256 = vmatpush1.msra.mxu0 0.0
          %1257 = vmatprep.subr.mxu0 0.0
          %1258 = vmatpush1.msra.mxu0 0.0
          %1259 = vmatprep.subr.mxu0 0.0
          %1260 = vmatpush1.msra.mxu0 0.0
          %1261 = vmatprep.subr.mxu0 0.0
          %1262 = vmatpush1.msra.mxu0 0.0
          %1263 = vmatprep.subr.mxu0 0.0
          %1264 = vmatpush1.msra.mxu0 0.0
          %1265 = vmatprep.subr.mxu0 0.0
          %1266 = vmatpush1.msra.mxu0 0.0
          %1267 = vmatprep.subr.mxu0 0.0
          %1268 = vmatpush1.msra.mxu0 0.0
          %1269 = vmatprep.subr.mxu0 0.0
          %1270 = vmatpush1.msra.mxu0 0.0
          %1271 = vmatprep.subr.mxu0 0.0
          %1272 = vmatpush1.msra.mxu0 0.0
          %1273 = vmatprep.subr.mxu0 0.0
          %1274 = vmatpush1.msra.mxu0 0.0
          %1275 = vmatprep.subr.mxu0 0.0
          %1276 = vmatpush1.msra.mxu0 0.0
          %1277 = vmatprep.subr.mxu0 0.0
          %1278 = vmatpush1.msra.mxu0 0.0
          %1279 = vmatprep.subr.mxu0 0.0
          %1280 = vmatpush1.msra.mxu0 0.0
          %1281 = vmatprep.subr.mxu0 0.0
          %1282 = vmatpush1.msra.mxu0 0.0
          %1283 = vmatprep.subr.mxu0 0.0
          %1284 = vmatpush1.msra.mxu0 0.0
          %1285 = vmatprep.subr.mxu0 0.0
          %1286 = vmatpush1.msra.mxu0 0.0
          %1287 = vmatprep.mubr.f32.mxu0 0.0
          %1288 = vmatmul.mubr.f32.gmra.mrb[0].mxu0 %v1221
          %v1289 = vpop.f32.mrb[0].mxu0
          %v1290 = vadd.f32 0.0, %v1289
          %v1291 = vpop.f32.mrb[0].mxu0
          %1292 = vdwg.mxu0
          %v1294 = vsel %vm1175, %v1215, 0
          %1296 = vmatprep.subr.mxu0 0.0
          %1297 = vmatpush1.msra.mxu0 %v852
          %1298 = vmatprep.subr.mxu0 0.0
          %1299 = vmatpush1.msra.mxu0 %v853
          %1300 = vmatprep.subr.mxu0 0.0
          %1301 = vmatpush1.msra.mxu0 0.0
          %1302 = vmatprep.subr.mxu0 0.0
          %1303 = vmatpush1.msra.mxu0 0.0
          %1304 = vmatprep.subr.mxu0 0.0
          %1305 = vmatpush1.msra.mxu0 0.0
          %1306 = vmatprep.subr.mxu0 0.0
          %1307 = vmatpush1.msra.mxu0 0.0
          %1308 = vmatprep.subr.mxu0 0.0
          %1309 = vmatpush1.msra.mxu0 0.0
          %1310 = vmatprep.subr.mxu0 0.0
          %1311 = vmatpush1.msra.mxu0 0.0
          %1312 = vmatprep.subr.mxu0 0.0
          %1313 = vmatpush1.msra.mxu0 0.0
          %1314 = vmatprep.subr.mxu0 0.0
          %1315 = vmatpush1.msra.mxu0 0.0
          %1316 = vmatprep.subr.mxu0 0.0
          %1317 = vmatpush1.msra.mxu0 0.0
          %1318 = vmatprep.subr.mxu0 0.0
          %1319 = vmatpush1.msra.mxu0 0.0
          %1320 = vmatprep.subr.mxu0 0.0
          %1321 = vmatpush1.msra.mxu0 0.0
          %1322 = vmatprep.subr.mxu0 0.0
          %1323 = vmatpush1.msra.mxu0 0.0
          %1324 = vmatprep.subr.mxu0 0.0
          %1325 = vmatpush1.msra.mxu0 0.0
          %1326 = vmatprep.subr.mxu0 0.0
          %1327 = vmatpush1.msra.mxu0 0.0
          %1328 = vmatprep.subr.mxu0 0.0
          %1329 = vmatpush1.msra.mxu0 0.0
          %1330 = vmatprep.subr.mxu0 0.0
          %1331 = vmatpush1.msra.mxu0 0.0
          %1332 = vmatprep.subr.mxu0 0.0
          %1333 = vmatpush1.msra.mxu0 0.0
          %1334 = vmatprep.subr.mxu0 0.0
          %1335 = vmatpush1.msra.mxu0 0.0
          %1336 = vmatprep.subr.mxu0 0.0
          %1337 = vmatpush1.msra.mxu0 0.0
          %1338 = vmatprep.subr.mxu0 0.0
          %1339 = vmatpush1.msra.mxu0 0.0
          %1340 = vmatprep.subr.mxu0 0.0
          %1341 = vmatpush1.msra.mxu0 0.0
          %1342 = vmatprep.subr.mxu0 0.0
          %1343 = vmatpush1.msra.mxu0 0.0
          %1344 = vmatprep.subr.mxu0 0.0
          %1345 = vmatpush1.msra.mxu0 0.0
          %1346 = vmatprep.subr.mxu0 0.0
          %1347 = vmatpush1.msra.mxu0 0.0
          %1348 = vmatprep.subr.mxu0 0.0
          %1349 = vmatpush1.msra.mxu0 0.0
          %1350 = vmatprep.subr.mxu0 0.0
          %1351 = vmatpush1.msra.mxu0 0.0
          %1352 = vmatprep.subr.mxu0 0.0
          %1353 = vmatpush1.msra.mxu0 0.0
          %1354 = vmatprep.subr.mxu0 0.0
          %1355 = vmatpush1.msra.mxu0 0.0
          %1356 = vmatprep.subr.mxu0 0.0
          %1357 = vmatpush1.msra.mxu0 0.0
          %1358 = vmatprep.subr.mxu0 0.0
          %1359 = vmatpush1.msra.mxu0 0.0
          %1360 = vmatprep.mubr.f32.mxu0 0.0
          %1361 = vmatmul.mubr.f32.gmra.mrb[0].mxu0 %v1294
          %v1362 = vpop.f32.mrb[0].mxu0
          %v1363 = vadd.f32 0.0, %v1362
          %v1364 = vpop.f32.mrb[0].mxu0
          %1365 = vdwg.mxu0
          %v1367 = vsel %vm1175, %v1217, 0
          %1369 = vmatprep.subr.mxu0 0.0
          %1370 = vmatpush1.msra.mxu0 %v854
          %1371 = vmatprep.subr.mxu0 0.0
          %1372 = vmatpush1.msra.mxu0 %v855
          %1373 = vmatprep.subr.mxu0 0.0
          %1374 = vmatpush1.msra.mxu0 0.0
          %1375 = vmatprep.subr.mxu0 0.0
          %1376 = vmatpush1.msra.mxu0 0.0
          %1377 = vmatprep.subr.mxu0 0.0
          %1378 = vmatpush1.msra.mxu0 0.0
          %1379 = vmatprep.subr.mxu0 0.0
          %1380 = vmatpush1.msra.mxu0 0.0
          %1381 = vmatprep.subr.mxu0 0.0
          %1382 = vmatpush1.msra.mxu0 0.0
          %1383 = vmatprep.subr.mxu0 0.0
          %1384 = vmatpush1.msra.mxu0 0.0
          %1385 = vmatprep.subr.mxu0 0.0
          %1386 = vmatpush1.msra.mxu0 0.0
          %1387 = vmatprep.subr.mxu0 0.0
          %1388 = vmatpush1.msra.mxu0 0.0
          %1389 = vmatprep.subr.mxu0 0.0
          %1390 = vmatpush1.msra.mxu0 0.0
          %1391 = vmatprep.subr.mxu0 0.0
          %1392 = vmatpush1.msra.mxu0 0.0
          %1393 = vmatprep.subr.mxu0 0.0
          %1394 = vmatpush1.msra.mxu0 0.0
          %1395 = vmatprep.subr.mxu0 0.0
          %1396 = vmatpush1.msra.mxu0 0.0
          %1397 = vmatprep.subr.mxu0 0.0
          %1398 = vmatpush1.msra.mxu0 0.0
          %1399 = vmatprep.subr.mxu0 0.0
          %1400 = vmatpush1.msra.mxu0 0.0
          %1401 = vmatprep.subr.mxu0 0.0
          %1402 = vmatpush1.msra.mxu0 0.0
          %1403 = vmatprep.subr.mxu0 0.0
          %1404 = vmatpush1.msra.mxu0 0.0
          %1405 = vmatprep.subr.mxu0 0.0
          %1406 = vmatpush1.msra.mxu0 0.0
          %1407 = vmatprep.subr.mxu0 0.0
          %1408 = vmatpush1.msra.mxu0 0.0
          %1409 = vmatprep.subr.mxu0 0.0
          %1410 = vmatpush1.msra.mxu0 0.0
          %1411 = vmatprep.subr.mxu0 0.0
          %1412 = vmatpush1.msra.mxu0 0.0
          %1413 = vmatprep.subr.mxu0 0.0
          %1414 = vmatpush1.msra.mxu0 0.0
          %1415 = vmatprep.subr.mxu0 0.0
          %1416 = vmatpush1.msra.mxu0 0.0
          %1417 = vmatprep.subr.mxu0 0.0
          %1418 = vmatpush1.msra.mxu0 0.0
          %1419 = vmatprep.subr.mxu0 0.0
          %1420 = vmatpush1.msra.mxu0 0.0
          %1421 = vmatprep.subr.mxu0 0.0
          %1422 = vmatpush1.msra.mxu0 0.0
          %1423 = vmatprep.subr.mxu0 0.0
          %1424 = vmatpush1.msra.mxu0 0.0
          %1425 = vmatprep.subr.mxu0 0.0
          %1426 = vmatpush1.msra.mxu0 0.0
          %1427 = vmatprep.subr.mxu0 0.0
          %1428 = vmatpush1.msra.mxu0 0.0
          %1429 = vmatprep.subr.mxu0 0.0
          %1430 = vmatpush1.msra.mxu0 0.0
          %1431 = vmatprep.subr.mxu0 0.0
          %1432 = vmatpush1.msra.mxu0 0.0
          %1433 = vmatprep.mubr.f32.mxu0 0.0
          %1434 = vmatmul.mubr.f32.gmra.mrb[0].mxu0 %v1367
          %v1435 = vpop.f32.mrb[0].mxu0
          %v1436 = vadd.f32 0.0, %v1435
          %v1437 = vpop.f32.mrb[0].mxu0
          %1438 = vdwg.mxu0
          %v1440 = vsel %vm1175, %v1219, 0
          %1442 = vmatprep.subr.mxu0 0.0
          %1443 = vmatpush1.msra.mxu0 %v856
          %1444 = vmatprep.subr.mxu0 0.0
          %1445 = vmatpush1.msra.mxu0 %v857
          %1446 = vmatprep.subr.mxu0 0.0
          %1447 = vmatpush1.msra.mxu0 0.0
          %1448 = vmatprep.subr.mxu0 0.0
          %1449 = vmatpush1.msra.mxu0 0.0
          %1450 = vmatprep.subr.mxu0 0.0
          %1451 = vmatpush1.msra.mxu0 0.0
          %1452 = vmatprep.subr.mxu0 0.0
          %1453 = vmatpush1.msra.mxu0 0.0
          %1454 = vmatprep.subr.mxu0 0.0
          %1455 = vmatpush1.msra.mxu0 0.0
          %1456 = vmatprep.subr.mxu0 0.0
          %1457 = vmatpush1.msra.mxu0 0.0
          %1458 = vmatprep.subr.mxu0 0.0
          %1459 = vmatpush1.msra.mxu0 0.0
          %1460 = vmatprep.subr.mxu0 0.0
          %1461 = vmatpush1.msra.mxu0 0.0
          %1462 = vmatprep.subr.mxu0 0.0
          %1463 = vmatpush1.msra.mxu0 0.0
          %1464 = vmatprep.subr.mxu0 0.0
          %1465 = vmatpush1.msra.mxu0 0.0
          %1466 = vmatprep.subr.mxu0 0.0
          %1467 = vmatpush1.msra.mxu0 0.0
          %1468 = vmatprep.subr.mxu0 0.0
          %1469 = vmatpush1.msra.mxu0 0.0
          %1470 = vmatprep.subr.mxu0 0.0
          %1471 = vmatpush1.msra.mxu0 0.0
          %1472 = vmatprep.subr.mxu0 0.0
          %1473 = vmatpush1.msra.mxu0 0.0
          %1474 = vmatprep.subr.mxu0 0.0
          %1475 = vmatpush1.msra.mxu0 0.0
          %1476 = vmatprep.subr.mxu0 0.0
          %1477 = vmatpush1.msra.mxu0 0.0
          %1478 = vmatprep.subr.mxu0 0.0
          %1479 = vmatpush1.msra.mxu0 0.0
          %1480 = vmatprep.subr.mxu0 0.0
          %1481 = vmatpush1.msra.mxu0 0.0
          %1482 = vmatprep.subr.mxu0 0.0
          %1483 = vmatpush1.msra.mxu0 0.0
          %1484 = vmatprep.subr.mxu0 0.0
          %1485 = vmatpush1.msra.mxu0 0.0
          %1486 = vmatprep.subr.mxu0 0.0
          %1487 = vmatpush1.msra.mxu0 0.0
          %1488 = vmatprep.subr.mxu0 0.0
          %1489 = vmatpush1.msra.mxu0 0.0
          %1490 = vmatprep.subr.mxu0 0.0
          %1491 = vmatpush1.msra.mxu0 0.0
          %1492 = vmatprep.subr.mxu0 0.0
          %1493 = vmatpush1.msra.mxu0 0.0
          %1494 = vmatprep.subr.mxu0 0.0
          %1495 = vmatpush1.msra.mxu0 0.0
          %1496 = vmatprep.subr.mxu0 0.0
          %1497 = vmatpush1.msra.mxu0 0.0
          %1498 = vmatprep.subr.mxu0 0.0
          %1499 = vmatpush1.msra.mxu0 0.0
          %1500 = vmatprep.subr.mxu0 0.0
          %1501 = vmatpush1.msra.mxu0 0.0
          %1502 = vmatprep.subr.mxu0 0.0
          %1503 = vmatpush1.msra.mxu0 0.0
          %1504 = vmatprep.subr.mxu0 0.0
          %1505 = vmatpush1.msra.mxu0 0.0
          %1506 = vmatprep.mubr.f32.mxu0 0.0
          %1507 = vmatmul.mubr.f32.gmra.mrb[0].mxu0 %v1440
          %v1508 = vpop.f32.mrb[0].mxu0
          %v1509 = vadd.f32 0.0, %v1508
          %v1510 = vpop.f32.mrb[0].mxu0
          %1511 = vdwg.mxu0
          %v1512 = vcombine.low %v1290, %v1436
          %v1513 = vcombine.high %v1290, %v1436
          %v1515 = vunpack.c.l.s4 1983009808
          %v1516 = vunpack.c.0.s8 %v1515
          %v1517 = vlaneseq
          %v1518 = vshrl.u32 %v1517, 7
          %v1519 = vsub.s32 %v1516, %v1518
          %v1520 = vrot.slane %v1512, %v1519
          %v1522 = vunpack.c.l.s4 1983009808
          %v1523 = vunpack.c.0.s8 %v1522
          %v1524 = vlaneseq
          %v1525 = vshrl.u32 %v1524, 7
          %v1526 = vsub.s32 %v1523, %v1525
          %v1527 = vrot.slane %v1513, %v1526
          %v1528 = vcombine.low %v1363, %v1509
          %v1529 = vcombine.high %v1363, %v1509
          %v1531 = vunpack.c.l.s4 1983009808
          %v1532 = vunpack.c.0.s8 %v1531
          %v1533 = vlaneseq
          %v1534 = vshrl.u32 %v1533, 7
          %v1535 = vsub.s32 %v1532, %v1534
          %v1536 = vrot.slane %v1528, %v1535
          %v1538 = vunpack.c.l.s4 1983009808
          %v1539 = vunpack.c.0.s8 %v1538
          %v1540 = vlaneseq
          %v1541 = vshrl.u32 %v1540, 7
          %v1542 = vsub.s32 %v1539, %v1541
          %v1543 = vrot.slane %v1529, %v1542
          %v1544 = vcombine.low %v1520, %v1536
          %v1545 = vcombine.high %v1520, %v1536
          %v1547 = vunpack.c.l.s4 1934713408
          %v1548 = vunpack.c.0.s8 %v1547
          %v1549 = vlaneseq
          %v1550 = vshrl.u32 %v1549, 7
          %v1551 = vsub.s32 %v1548, %v1550
          %v1552 = vrot.slane %v1544, %v1551
          %v1554 = vunpack.c.l.s4 1934713408
          %v1555 = vunpack.c.0.s8 %v1554
          %v1556 = vlaneseq
          %v1557 = vshrl.u32 %v1556, 7
          %v1558 = vsub.s32 %v1555, %v1557
          %v1559 = vrot.slane %v1545, %v1558
          %v1560 = vcombine.low %v1527, %v1543
          %v1561 = vcombine.high %v1527, %v1543
          %v1563 = vunpack.c.l.s4 1934713408
          %v1564 = vunpack.c.0.s8 %v1563
          %v1565 = vlaneseq
          %v1566 = vshrl.u32 %v1565, 7
          %v1567 = vsub.s32 %v1564, %v1566
          %v1568 = vrot.slane %v1560, %v1567
          %v1570 = vunpack.c.l.s4 1934713408
          %v1571 = vunpack.c.0.s8 %v1570
          %v1572 = vlaneseq
          %v1573 = vshrl.u32 %v1572, 7
          %v1574 = vsub.s32 %v1571, %v1573
          %v1575 = vrot.slane %v1561, %v1574
          %v1576 = vcombine.high %v1552, 0.0
          %v1577 = vcombine.high %v1559, 0.0
          %v1578 = vcombine.high %v1568, 0.0
          %v1579 = vcombine.high %v1575, 0.0
          %v1580 = vcombine.low %v1552, %v1559
          %v1582 = vunpack.c.l.s4 1983009808
          %v1583 = vunpack.c.0.s8 %v1582
          %v1584 = vlaneseq
          %v1585 = vshrl.u32 %v1584, 7
          %v1586 = vsub.s32 %v1583, %v1585
          %v1587 = vrot.slane %v1580, %v1586
          %v1588 = vcombine.low %v1576, %v1577
          %v1590 = vunpack.c.l.s4 1983009808
          %v1591 = vunpack.c.0.s8 %v1590
          %v1592 = vlaneseq
          %v1593 = vshrl.u32 %v1592, 7
          %v1594 = vsub.s32 %v1591, %v1593
          %v1595 = vrot.slane %v1588, %v1594
          %v1596 = vcombine.low %v1568, %v1575
          %v1598 = vunpack.c.l.s4 1983009808
          %v1599 = vunpack.c.0.s8 %v1598
          %v1600 = vlaneseq
          %v1601 = vshrl.u32 %v1600, 7
          %v1602 = vsub.s32 %v1599, %v1601
          %v1603 = vrot.slane %v1596, %v1602
          %v1604 = vcombine.low %v1578, %v1579
          %v1606 = vunpack.c.l.s4 1983009808
          %v1607 = vunpack.c.0.s8 %v1606
          %v1608 = vlaneseq
          %v1609 = vshrl.u32 %v1608, 7
          %v1610 = vsub.s32 %v1607, %v1609
          %v1611 = vrot.slane %v1604, %v1610
          %v1612 = vcombine.low %v1587, %v1595
          %v1613 = vcombine.high %v1587, %v1595
          %v1615 = vunpack.c.l.s4 1934713408
          %v1616 = vunpack.c.0.s8 %v1615
          %v1617 = vlaneseq
          %v1618 = vshrl.u32 %v1617, 7
          %v1619 = vsub.s32 %v1616, %v1618
          %v1620 = vrot.slane %v1612, %v1619
          %v1622 = vunpack.c.l.s4 1934713408
          %v1623 = vunpack.c.0.s8 %v1622
          %v1624 = vlaneseq
          %v1625 = vshrl.u32 %v1624, 7
          %v1626 = vsub.s32 %v1623, %v1625
          %v1627 = vrot.slane %v1613, %v1626
          %v1628 = vcombine.low %v1603, %v1611
          %v1629 = vcombine.high %v1603, %v1611
          %v1631 = vunpack.c.l.s4 1934713408
          %v1632 = vunpack.c.0.s8 %v1631
          %v1633 = vlaneseq
          %v1634 = vshrl.u32 %v1633, 7
          %v1635 = vsub.s32 %v1632, %v1634
          %v1636 = vrot.slane %v1628, %v1635
          %v1638 = vunpack.c.l.s4 1934713408
          %v1639 = vunpack.c.0.s8 %v1638
          %v1640 = vlaneseq
          %v1641 = vshrl.u32 %v1640, 7
          %v1642 = vsub.s32 %v1639, %v1641
          %v1643 = vrot.slane %v1629, %v1642
          %v1644 = vcombine.low %v1620, %v1636
          %v1645 = vcombine.high %v1620, %v1636
          %v1646 = vcombine.low %v1627, %v1643
          %v1647 = vcombine.high %v1627, %v1643
          %1649 = vrot.lane.b32.xlu0 %v1645, 8
          %v1650 = vpop.permute.xlu0 %1649
          %1653 = vrot.lane.b32.xlu0 %v1646, 16
          %v1654 = vpop.permute.xlu0 %1653
          %1657 = vrot.lane.b32.xlu0 %v1647, 24
          %v1658 = vpop.permute.xlu0 %1657
          %v1660 = vsel %vm858, %v1644, %v1650
          %v1661 = vsel %vm1175, %v1660, %v1654
          %vm1662 = vcmask 195584
          %v1663 = vsel %vm1662, %v1661, %v1658
          %v1664 = vld [vmem:[%s4] sm:$0xff]
          %v1665 = vld [vmem:[%s4 + $0x8] sm:$0xff]
          %v1666 = vld [vmem:[%s4 + $0x10] sm:$0xff]
          %v1667 = vld [vmem:[%s4 + $0x18] sm:$0xff]
          %v1669 = vsel %vm622, %v1663, 0
          %1671 = vmatprep.subr.mxu0 0.0
          %1672 = vmatpush1.msra.mxu0 %v1664
          %1673 = vmatprep.subr.mxu0 0.0
          %1674 = vmatpush1.msra.mxu0 %v1665
          %1675 = vmatprep.subr.mxu0 0.0
          %1676 = vmatpush1.msra.mxu0 %v1666
          %1677 = vmatprep.subr.mxu0 0.0
          %1678 = vmatpush1.msra.mxu0 %v1667
          %1679 = vmatprep.subr.mxu0 0.0
          %1680 = vmatpush1.msra.mxu0 0.0
          %1681 = vmatprep.subr.mxu0 0.0
          %1682 = vmatpush1.msra.mxu0 0.0
          %1683 = vmatprep.subr.mxu0 0.0
          %1684 = vmatpush1.msra.mxu0 0.0
          %1685 = vmatprep.subr.mxu0 0.0
          %1686 = vmatpush1.msra.mxu0 0.0
          %1687 = vmatprep.subr.mxu0 0.0
          %1688 = vmatpush1.msra.mxu0 0.0
          %1689 = vmatprep.subr.mxu0 0.0
          %1690 = vmatpush1.msra.mxu0 0.0
          %1691 = vmatprep.subr.mxu0 0.0
          %1692 = vmatpush1.msra.mxu0 0.0
          %1693 = vmatprep.subr.mxu0 0.0
          %1694 = vmatpush1.msra.mxu0 0.0
          %1695 = vmatprep.subr.mxu0 0.0
          %1696 = vmatpush1.msra.mxu0 0.0
          %1697 = vmatprep.subr.mxu0 0.0
          %1698 = vmatpush1.msra.mxu0 0.0
          %1699 = vmatprep.subr.mxu0 0.0
          %1700 = vmatpush1.msra.mxu0 0.0
          %1701 = vmatprep.subr.mxu0 0.0
          %1702 = vmatpush1.msra.mxu0 0.0
          %1703 = vmatprep.subr.mxu0 0.0
          %1704 = vmatpush1.msra.mxu0 0.0
          %1705 = vmatprep.subr.mxu0 0.0
          %1706 = vmatpush1.msra.mxu0 0.0
          %1707 = vmatprep.subr.mxu0 0.0
          %1708 = vmatpush1.msra.mxu0 0.0
          %1709 = vmatprep.subr.mxu0 0.0
          %1710 = vmatpush1.msra.mxu0 0.0
          %1711 = vmatprep.subr.mxu0 0.0
          %1712 = vmatpush1.msra.mxu0 0.0
          %1713 = vmatprep.subr.mxu0 0.0
          %1714 = vmatpush1.msra.mxu0 0.0
          %1715 = vmatprep.subr.mxu0 0.0
          %1716 = vmatpush1.msra.mxu0 0.0
          %1717 = vmatprep.subr.mxu0 0.0
          %1718 = vmatpush1.msra.mxu0 0.0
          %1719 = vmatprep.subr.mxu0 0.0
          %1720 = vmatpush1.msra.mxu0 0.0
          %1721 = vmatprep.subr.mxu0 0.0
          %1722 = vmatpush1.msra.mxu0 0.0
          %1723 = vmatprep.subr.mxu0 0.0
          %1724 = vmatpush1.msra.mxu0 0.0
          %1725 = vmatprep.subr.mxu0 0.0
          %1726 = vmatpush1.msra.mxu0 0.0
          %1727 = vmatprep.subr.mxu0 0.0
          %1728 = vmatpush1.msra.mxu0 0.0
          %1729 = vmatprep.subr.mxu0 0.0
          %1730 = vmatpush1.msra.mxu0 0.0
          %1731 = vmatprep.subr.mxu0 0.0
          %1732 = vmatpush1.msra.mxu0 0.0
          %1733 = vmatprep.subr.mxu0 0.0
          %1734 = vmatpush1.msra.mxu0 0.0
          %1735 = vmatprep.mubr.f32.mxu0 0.0
          %1736 = vmatmul.mubr.f32.gmra.mrb[0].mxu0 %v1669
          %v1737 = vpop.f32.mrb[0].mxu0
          %v1738 = vadd.f32 %v617, %v1737
          %v1739 = vpop.f32.mrb[0].mxu0
          %1740 = vdwg.mxu0
          %v1741 = vld [vmem:[%s9] sm:$0x1]
          %v1742 = vld [vmem:[%s10] sm:$0x1]
          %v1743 = vsel %vm622, %v1738, 0.0
          %1744 = vadd.xlane.f32.xlu0 %v1743
          %v1745 = vpop.xlane.xlu0 %1744
          %v1746 = vrcp.pop 32.0
          %v1747 = vmul.f32 %v1745, %v1746
          %v1748 = vsub.f32 %v1738, %v1747
          %v1749 = vmul.f32 %v1748, %v1748
          %v1750 = vsel %vm622, %v1749, 0.0
          %1751 = vadd.xlane.f32.xlu0 %v1750
          %v1752 = vpop.xlane.xlu0 %1751
          %v1753 = vmul.f32 %v1752, %v1746
          %v1754 = vadd.f32 %v1753, 1e-05
          %v1755 = vrsqrt.pop %v1754
          %v1756 = vmul.f32 %v1748, %v1755
          %v1758 = vlaneseq
          %v1759 = vshrl.u32 %v1758, 7
          %v1760 = vsub.s32 0, %v1759
          %v1761 = vrot.slane %v1741, %v1760
          %v1763 = vmul.f32 %v1756, %v1761
          %v1765 = vlaneseq
          %v1766 = vshrl.u32 %v1765, 7
          %v1767 = vsub.s32 0, %v1766
          %v1768 = vrot.slane %v1742, %v1767
          %v1770 = vadd.f32 %v1763, %v1768
          %1771 = vst.msk [vmem:[#allocation2] sm:$0xff] %vm622, %v1770
          %1772 = vst.msk [vmem:[#allocation3] sm:$0xff] %vm622, %v1770
          %1773 = vst.msk [vmem:[#allocation4] sm:$0xff] %vm622, 0.0
        $region114: #{tpu_custom_call.1} parent=105 // pred_fallthru
          _
        %v1774 = vld [vmem:[#allocation3] sm:$0xff]
        %v1775 = vld [vmem:[%s519] sm:$0xff]
        %v1776 = vld [vmem:[%s519 + $0x8] sm:$0xff]
        %v1777 = vld [vmem:[%s519 + $0x10] sm:$0xff]
        %v1778 = vld [vmem:[%s519 + $0x18] sm:$0xff]
        %v1779 = vld [vmem:[%s606] sm:$0x1]
        %v1781 = vlaneseq
        %v1782 = vshrl.u32 %v1781, 7
        %v1783 = vsub.s32 0, %v1782
        %v1784 = vrot.slane %v1779, %v1783
        %vm1786 = vcmask 261120
        %v1788 = vsel %vm1786, %v1774, 0
        %1790 = vmatprep.subr.mxu0 0.0
        %1791 = vmatpush1.msra.mxu0 %v1775
        %1792 = vmatprep.subr.mxu0 0.0
        %1793 = vmatpush1.msra.mxu0 %v1776
        %1794 = vmatprep.subr.mxu0 0.0
        %1795 = vmatpush1.msra.mxu0 %v1777
        %1796 = vmatprep.subr.mxu0 0.0
        %1797 = vmatpush1.msra.mxu0 %v1778
        %1798 = vmatprep.subr.mxu0 0.0
        %1799 = vmatpush1.msra.mxu0 0.0
        %1800 = vmatprep.subr.mxu0 0.0
        %1801 = vmatpush1.msra.mxu0 0.0
        %1802 = vmatprep.subr.mxu0 0.0
        %1803 = vmatpush1.msra.mxu0 0.0
        %1804 = vmatprep.subr.mxu0 0.0
        %1805 = vmatpush1.msra.mxu0 0.0
        %1806 = vmatprep.subr.mxu0 0.0
        %1807 = vmatpush1.msra.mxu0 0.0
        %1808 = vmatprep.subr.mxu0 0.0
        %1809 = vmatpush1.msra.mxu0 0.0
        %1810 = vmatprep.subr.mxu0 0.0
        %1811 = vmatpush1.msra.mxu0 0.0
        %1812 = vmatprep.subr.mxu0 0.0
        %1813 = vmatpush1.msra.mxu0 0.0
        %1814 = vmatprep.subr.mxu0 0.0
        %1815 = vmatpush1.msra.mxu0 0.0
        %1816 = vmatprep.subr.mxu0 0.0
        %1817 = vmatpush1.msra.mxu0 0.0
        %1818 = vmatprep.subr.mxu0 0.0
        %1819 = vmatpush1.msra.mxu0 0.0
        %1820 = vmatprep.subr.mxu0 0.0
        %1821 = vmatpush1.msra.mxu0 0.0
        %1822 = vmatprep.subr.mxu0 0.0
        %1823 = vmatpush1.msra.mxu0 0.0
        %1824 = vmatprep.subr.mxu0 0.0
        %1825 = vmatpush1.msra.mxu0 0.0
        %1826 = vmatprep.subr.mxu0 0.0
        %1827 = vmatpush1.msra.mxu0 0.0
        %1828 = vmatprep.subr.mxu0 0.0
        %1829 = vmatpush1.msra.mxu0 0.0
        %1830 = vmatprep.subr.mxu0 0.0
        %1831 = vmatpush1.msra.mxu0 0.0
        %1832 = vmatprep.subr.mxu0 0.0
        %1833 = vmatpush1.msra.mxu0 0.0
        %1834 = vmatprep.subr.mxu0 0.0
        %1835 = vmatpush1.msra.mxu0 0.0
        %1836 = vmatprep.subr.mxu0 0.0
        %1837 = vmatpush1.msra.mxu0 0.0
        %1838 = vmatprep.subr.mxu0 0.0
        %1839 = vmatpush1.msra.mxu0 0.0
        %1840 = vmatprep.subr.mxu0 0.0
        %1841 = vmatpush1.msra.mxu0 0.0
        %1842 = vmatprep.subr.mxu0 0.0
        %1843 = vmatpush1.msra.mxu0 0.0
        %1844 = vmatprep.subr.mxu0 0.0
        %1845 = vmatpush1.msra.mxu0 0.0
        %1846 = vmatprep.subr.mxu0 0.0
        %1847 = vmatpush1.msra.mxu0 0.0
        %1848 = vmatprep.subr.mxu0 0.0
        %1849 = vmatpush1.msra.mxu0 0.0
        %1850 = vmatprep.subr.mxu0 0.0
        %1851 = vmatpush1.msra.mxu0 0.0
        %1852 = vmatprep.subr.mxu0 0.0
        %1853 = vmatpush1.msra.mxu0 0.0
        %1854 = vmatprep.mubr.f32.mxu0 0.0
        %1855 = vmatmul.mubr.f32.gmra.mrb[0].mxu0 %v1788
        %v1856 = vpop.f32.mrb[0].mxu0
        %v1857 = vadd.f32 %v1784, %v1856
        %v1858 = vpop.f32.mrb[0].mxu0
        %1859 = vdwg.mxu0
        %v1860 = vmax.f32 %v1857, 0.0
        %v1861 = vld [vmem:[#allocation4] sm:$0xff]
        %v1862 = vld [vmem:[%s611] sm:$0xff]
        %v1863 = vld [vmem:[%s611 + $0x8] sm:$0xff]
        %v1864 = vld [vmem:[%s611 + $0x10] sm:$0xff]
        %v1865 = vld [vmem:[%s611 + $0x18] sm:$0xff]
        %v1866 = vld [vmem:[%s611 + $0x20] sm:$0xff]
        %v1867 = vld [vmem:[%s611 + $0x28] sm:$0xff]
        %v1868 = vld [vmem:[%s611 + $0x30] sm:$0xff]
        %v1869 = vld [vmem:[%s611 + $0x38] sm:$0xff]
        %v1870 = vld [vmem:[%s611 + $0x40] sm:$0xff]
        %v1871 = vld [vmem:[%s611 + $0x48] sm:$0xff]
        %v1872 = vld [vmem:[%s611 + $0x50] sm:$0xff]
        %v1873 = vld [vmem:[%s611 + $0x58] sm:$0xff]
        %v1874 = vld [vmem:[%s611 + $0x60] sm:$0xff]
        %v1875 = vld [vmem:[%s611 + $0x68] sm:$0xff]
        %v1876 = vld [vmem:[%s611 + $0x70] sm:$0xff]
        %v1877 = vld [vmem:[%s611 + $0x78] sm:$0xff]
        %1878 = vmatprep.subr.mxu0 0.0
        %1879 = vmatpush1.msra.mxu0 %v1862
        %1880 = vmatprep.subr.mxu0 0.0
        %1881 = vmatpush1.msra.mxu0 %v1863
        %1882 = vmatprep.subr.mxu0 0.0
        %1883 = vmatpush1.msra.mxu0 %v1864
        %1884 = vmatprep.subr.mxu0 0.0
        %1885 = vmatpush1.msra.mxu0 %v1865
        %1886 = vmatprep.subr.mxu0 0.0
        %1887 = vmatpush1.msra.mxu0 %v1866
        %1888 = vmatprep.subr.mxu0 0.0
        %1889 = vmatpush1.msra.mxu0 %v1867
        %1890 = vmatprep.subr.mxu0 0.0
        %1891 = vmatpush1.msra.mxu0 %v1868
        %1892 = vmatprep.subr.mxu0 0.0
        %1893 = vmatpush1.msra.mxu0 %v1869
        %1894 = vmatprep.subr.mxu0 0.0
        %1895 = vmatpush1.msra.mxu0 %v1870
        %1896 = vmatprep.subr.mxu0 0.0
        %1897 = vmatpush1.msra.mxu0 %v1871
        %1898 = vmatprep.subr.mxu0 0.0
        %1899 = vmatpush1.msra.mxu0 %v1872
        %1900 = vmatprep.subr.mxu0 0.0
        %1901 = vmatpush1.msra.mxu0 %v1873
        %1902 = vmatprep.subr.mxu0 0.0
        %1903 = vmatpush1.msra.mxu0 %v1874
        %1904 = vmatprep.subr.mxu0 0.0
        %1905 = vmatpush1.msra.mxu0 %v1875
        %1906 = vmatprep.subr.mxu0 0.0
        %1907 = vmatpush1.msra.mxu0 %v1876
        %1908 = vmatprep.subr.mxu0 0.0
        %1909 = vmatpush1.msra.mxu0 %v1877
        %1910 = vmatprep.subr.mxu0 0.0
        %1911 = vmatpush1.msra.mxu0 0.0
        %1912 = vmatprep.subr.mxu0 0.0
        %1913 = vmatpush1.msra.mxu0 0.0
        %1914 = vmatprep.subr.mxu0 0.0
        %1915 = vmatpush1.msra.mxu0 0.0
        %1916 = vmatprep.subr.mxu0 0.0
        %1917 = vmatpush1.msra.mxu0 0.0
        %1918 = vmatprep.subr.mxu0 0.0
        %1919 = vmatpush1.msra.mxu0 0.0
        %1920 = vmatprep.subr.mxu0 0.0
        %1921 = vmatpush1.msra.mxu0 0.0
        %1922 = vmatprep.subr.mxu0 0.0
        %1923 = vmatpush1.msra.mxu0 0.0
        %1924 = vmatprep.subr.mxu0 0.0
        %1925 = vmatpush1.msra.mxu0 0.0
        %1926 = vmatprep.subr.mxu0 0.0
        %1927 = vmatpush1.msra.mxu0 0.0
        %1928 = vmatprep.subr.mxu0 0.0
        %1929 = vmatpush1.msra.mxu0 0.0
        %1930 = vmatprep.subr.mxu0 0.0
        %1931 = vmatpush1.msra.mxu0 0.0
        %1932 = vmatprep.subr.mxu0 0.0
        %1933 = vmatpush1.msra.mxu0 0.0
        %1934 = vmatprep.subr.mxu0 0.0
        %1935 = vmatpush1.msra.mxu0 0.0
        %1936 = vmatprep.subr.mxu0 0.0
        %1937 = vmatpush1.msra.mxu0 0.0
        %1938 = vmatprep.subr.mxu0 0.0
        %1939 = vmatpush1.msra.mxu0 0.0
        %1940 = vmatprep.subr.mxu0 0.0
        %1941 = vmatpush1.msra.mxu0 0.0
        %1942 = vmatprep.mubr.f32.mxu0 0.0
        %1943 = vmatmul.mubr.f32.gmra.mrb[0].mxu0 %v1860
        %v1944 = vpop.f32.mrb[0].mxu0
        %v1945 = vadd.f32 0.0, %v1944
        %v1946 = vpop.f32.mrb[0].mxu0
        %1947 = vdwg.mxu0
        %v1948 = vadd.f32 %v1861, %v1945
        %1949 = vst.msk [vmem:[#allocation4] sm:$0xff] %vm1786, %v1948
        %p1950 = scmp.eq.s32.totalorder %s34, 1
        // Predicated region
        $region115: #{tpu_custom_call.1} parent=105 // pred_check
          %p1951 = pneg %p1950
        $region116: #{tpu_custom_call.1} parent=105 // pred_check_branch
          %1953 = sbr.rel (%p1951) target = $region118
        $region117: #{tpu_custom_call.1} parent=105 // pred_region
          %v1954 = vld [vmem:[#allocation4] sm:$0xff]
          %v1955 = vld [vmem:[%s8] sm:$0x1]
          %v1957 = vlaneseq
          %v1958 = vshrl.u32 %v1957, 7
          %v1959 = vsub.s32 0, %v1958
          %v1960 = vrot.slane %v1955, %v1959
          %v1962 = vadd.f32 %v1954, %v1960
          %v1963 = vld [vmem:[#allocation2] sm:$0xff]
          %v1964 = vadd.f32 %v1962, %v1963
          %v1965 = vld [vmem:[%s11] sm:$0x1]
          %v1966 = vld [vmem:[%s12] sm:$0x1]
          %v1967 = vsel %vm1786, %v1964, 0.0
          %1968 = vadd.xlane.f32.xlu0 %v1967
          %v1969 = vpop.xlane.xlu0 %1968
          %v1970 = vrcp.pop 32.0
          %v1971 = vmul.f32 %v1969, %v1970
          %v1972 = vsub.f32 %v1964, %v1971
          %v1973 = vmul.f32 %v1972, %v1972
          %v1974 = vsel %vm1786, %v1973, 0.0
          %1975 = vadd.xlane.f32.xlu0 %v1974
          %v1976 = vpop.xlane.xlu0 %1975
          %v1977 = vmul.f32 %v1976, %v1970
          %v1978 = vadd.f32 %v1977, 1e-05
          %v1979 = vrsqrt.pop %v1978
          %v1980 = vmul.f32 %v1972, %v1979
          %v1982 = vlaneseq
          %v1983 = vshrl.u32 %v1982, 7
          %v1984 = vsub.s32 0, %v1983
          %v1985 = vrot.slane %v1965, %v1984
          %v1987 = vmul.f32 %v1980, %v1985
          %v1989 = vlaneseq
          %v1990 = vshrl.u32 %v1989, 7
          %v1991 = vsub.s32 0, %v1990
          %v1992 = vrot.slane %v1966, %v1991
          %v1994 = vadd.f32 %v1987, %v1992
          %1995 = vst.msk [vmem:[%s585] sm:$0xff] %vm1786, %v1994
        $region118: #{tpu_custom_call.1} parent=105 // pred_fallthru
          _
        %s1996 = sand.u32 %s361, 1
        %s1997 = scalar_lea.sflag [#allocation7], %s1996
        %s1998 = sand.u32 %s361, 1
        %s1999 = smul.addr %s1998, 8
        %s2000 = scalar_lea.vmem [#allocation6], %s1999
        // Predicated region
        $region119: #{tpu_custom_call.1} parent=105 // pred_check
          %p2001 = pneg %p371
        $region120: #{tpu_custom_call.1} parent=105 // pred_check_branch
          %2003 = sbr.rel (%p2001) target = $region122
        $region121: #{tpu_custom_call.1} parent=105 // pred_region
          %s2005 = ssub.s32 128, 128
          %2006 = vsyncadd %s1997, %s2005
          %s2007 = smul.addr %s32, 2
          %s2008 = sadd.s32 %s33, %s2007
          %s2009 = smul.addr %s2008, 128
          %s2010 = scalar_lea.hbm %s13, %s2009
          %s2012 = sshll.u32 %s2000, 4
          %s2013 = int_to_ptr.vmem [resolvable:$true] %s2012
          %2015 = dma.vmem_to_hbm [thread:$0]  %s2013, 128, %s2010, %s1997
        $region122: #{tpu_custom_call.1} parent=105 // pred_fallthru
          _
      $region106: #{tpu_custom_call.1} parent=5 // pred_fallthru
        _
      %p2016 = scmp.le.s32.totalorder 2, %s22
      // Predicated region
      $region123: #{tpu_custom_call.1} parent=5 // pred_check
        %p2017 = pneg %p2016
      $region124: #{tpu_custom_call.1} parent=5 // pred_check_branch
        %2019 = sbr.rel (%p2017) target = $region126
      $region125: #{tpu_custom_call.1} parent=5 // pred_region
        %s2020 = ssub.s32 %s22, 2
        // Predicated region
        $region127: #{tpu_custom_call.1} parent=125 // pred_check
          %p2021 = pneg %p377
        $region128: #{tpu_custom_call.1} parent=125 // pred_check_branch
          %2023 = sbr.rel (%p2021) target = $region130
        $region129: #{tpu_custom_call.1} parent=125 // pred_region
          %s2024 = sand.u32 %s362, 1
          %s2025 = scalar_lea.sflag [#allocation7], %s2024
          %s2026 = sand.u32 %s362, 1
          %s2027 = smul.addr %s2026, 8
          %s2028 = scalar_lea.vmem [#allocation6], %s2027
          %2029 = dma.done %s2025, 128
        $region130: #{tpu_custom_call.1} parent=125 // pred_fallthru
          _
      $region126: #{tpu_custom_call.1} parent=5 // pred_fallthru
        _
    $region6: #{tpu_custom_call.1} parent=1 // loop_footer
      %s26 = sadd.s32 1, %s22
    $region7: #{tpu_custom_call.1} parent=1 // loop_footer_branch
      %21 = sbr.rel target = $region3
    $region8: #{tpu_custom_call.1} parent=1 // loop_exit
      _
    %2030 = vsyncpa [#allocation7], 1
    %s2031 = scalar_lea.sflag [#allocation7], 1
    %2032 = vsyncpa %s2031, 1

</llo_original>
